<compile_context>
chip_gen: v5e
topology: v5e:2x2
jax: 0.10.0
libtpu: 0.0.40
codegen_flags: <defaults>
</compile_context>

<pallas_src>
import numpy as np
import jax
import jax.numpy as jnp
from jax import lax
from jax.experimental import pallas as pl
from jax.experimental.pallas import tpu as pltpu

# ----- module hyper-parameters (GeneratorPathRegularizer.__init__ defaults) -----
LOSS_WEIGHT = 1.0
PL_BATCH_SHRINK = 1
DECAY = 0.01
PL_BATCH_SIZE = None
# mean_path_length buffer initialized to 0.0 (register_buffer in __init__)
# TODO(synk): sync_mean_buffer=True (dist.all_reduce of path_mean) not implemented here.

# ----- synthetic generator / problem sizes -----
N = 2            # batch (num_batches)
L = 8            # number of latent slots (num_ws in StyleGAN2)
D = 32           # latent dim
C, H, W = 4, 16, 16
LD = L * D       # 256
CHW = C * H * W  # 1024

assert CHW % 128 == 0
assert N <= 126              # lanes 126/127 of the stats slab hold path_mean / path_penalty


def _path_reg_kernel(mpl_ref, z_ref, w_ref, nz_ref, fake_ref, stats_ref):
    """Single-step kernel: whole W resident, no accumulator scratch, no phase gates."""
    z = z_ref[...].astype(jnp.bfloat16)     # (N, LD)   bf16 (cast in-kernel, VPU-trivial)
    w = w_ref[...]                          # (LD, CHW) bf16 (resident, canonical layout)
    nz = nz_ref[...].astype(jnp.bfloat16)   # (N, CHW)  bf16

    # 1) generator forward: fake = z @ W   (MXU, f32 accumulation, bf16 lane-dense output)
    fake = jnp.dot(z, w, preferred_element_type=jnp.float32)        # (N, CHW) f32
    fake_ref[...] = fake.astype(fake_ref.dtype)

    # 2) analytic latent gradient: grad^T = W @ noise^T  -> (LD, N).
    #    W is the canonical (M, K) LHS with K on lanes, so the big weight tile is never
    #    transposed; only the tiny (N, CHW) noise tile is re-oriented by the MXU feed.
    g = lax.dot_general(
        w, nz,
        dimension_numbers=(((1,), (1,)), ((), ())),
        preferred_element_type=jnp.float32)                         # (LD, N) f32

    # 3) path lengths, EMA mean path, path penalty.
    # path_lengths = sqrt( grad.pow(2).sum(dim=2).mean(dim=1) )
    #              = sqrt( sum over (L*D) of grad^2 / L )
    sq = jnp.sum(g * g, axis=0, keepdims=True) * (1.0 / L)          # (1, N)
    plen = jnp.sqrt(sq)                                             # (1, N)

    plen_mean = jnp.sum(plen) * (1.0 / N)
    mpl = mpl_ref[0]
    pmean = mpl + DECAY * (plen_mean - mpl)
    pen = jnp.sum((plen - pmean) ** 2) * (LOSS_WEIGHT / N)

    # Pack everything into one lane-dense (1, 128) slab -> single unmasked writeback:
    #   lanes [0, N): path_lengths, lane 126: path_mean, lane 127: path_penalty.
    # O(1) merge: pad plen to 128 lanes and add the scalar tail (lanes are disjoint).
    lane = lax.broadcasted_iota(jnp.int32, (1, 128), 1)
    tail = jnp.where(lane == 126, pmean, jnp.where(lane == 127, pen, 0.0))
    plen_pad = lax.pad(plen, jnp.float32(0.0), ((0, 0, 0), (0, 128 - N, 0)))
    stats_ref[...] = plen_pad + tail


def generator_path_regularizer(latents, gen_weight, noise_img, mean_path_length):
    """
    latents:          (N, L, D) float32
    gen_weight:       (L*D, C*H*W) bf16 (or f32) -- synthetic generator parameters
    noise_img:        (N, C, H, W) float32        -- already divided by sqrt(H*W)
    mean_path_length: scalar float32 buffer

    Returns (path_penalty, new_mean_path_length, path_lengths, fake_img)
    """
    z_flat = latents.reshape(N, LD)                      # f32; cast to bf16 inside kernel
    noise_flat = noise_img.reshape(N, CHW)               # f32; cast to bf16 inside kernel
    w_bf = gen_weight.astype(jnp.bfloat16)               # no-op if weights already bf16
    mpl_arr = jnp.reshape(mean_path_length.astype(jnp.float32), (1,))

    cost = pl.CostEstimate(
        flops=4 * N * LD * CHW,                          # forward + grad matmuls
        transcendentals=N,                               # sqrt per batch element
        bytes_accessed=(LD * CHW * 2                     # W (bf16)
                        + N * LD * 4 + N * CHW * 4       # latents + noise (f32 in)
                        + N * CHW * 2 + 128 * 4))        # fake (bf16) + stats slab

    grid_spec = pltpu.PrefetchScalarGridSpec(
        num_scalar_prefetch=0,
        grid=(1,),                                       # whole problem fits VMEM resident
        in_specs=[
            pl.BlockSpec(memory_space=pltpu.MemorySpace.SMEM),   # mean_path_length (1,)
            pl.BlockSpec((N, LD), lambda k: (0, 0)),             # latents
            pl.BlockSpec((LD, CHW), lambda k: (0, 0)),           # W (512 KiB bf16, resident)
            pl.BlockSpec((N, CHW), lambda k: (0, 0)),            # noise (lane-dense)
        ],
        out_specs=(
            pl.BlockSpec((N, CHW), lambda k: (0, 0)),            # fake_img (lane-dense bf16)
            pl.BlockSpec((1, 128), lambda k: (0, 0)),            # packed stats slab
        ),
    )

    fake_flat, stats = pl.pallas_call(
        _path_reg_kernel,
        out_shape=(
            jax.ShapeDtypeStruct((N, CHW), jnp.bfloat16),        # fake_img (flat, bf16)
            jax.ShapeDtypeStruct((1, 128), jnp.float32),         # [plen..., pmean, pen]
        ),
        grid_spec=grid_spec,
        compiler_params=pltpu.CompilerParams(
            dimension_semantics=("arbitrary",)),
        cost_estimate=cost,
    )(mpl_arr, z_flat, w_bf, noise_flat)

    fake_img = fake_flat.reshape(N, C, H, W)                     # NCHW, matches PyTorch
    path_lengths = stats[0, :N]
    path_mean = stats[0, 126]
    path_penalty = stats[0, 127]
    return path_penalty, path_mean, path_lengths, fake_img


def _reference(latents, gen_weight, noise_img, mean_path_length):
    """Pure-JAX reference of gen_path_regularizer (autograd path), on bf16-rounded inputs."""
    zb = latents.reshape(N, LD).astype(jnp.bfloat16).astype(jnp.float32)
    wb = gen_weight.astype(jnp.bfloat16).astype(jnp.float32)
    nb = noise_img.reshape(N, CHW).astype(jnp.bfloat16).astype(jnp.float32)

    def loss_fn(zf):
        fake = zf @ wb
        return jnp.sum(fake * nb)

    grad = jax.grad(loss_fn)(zb).reshape(N, L, D)
    path_lengths = jnp.sqrt(jnp.mean(jnp.sum(grad ** 2, axis=2), axis=1))
    path_mean = mean_path_length + DECAY * (path_lengths.mean() - mean_path_length)
    path_penalty = jnp.mean((path_lengths - path_mean) ** 2) * LOSS_WEIGHT
    fake_img = (zb @ wb).reshape(N, C, H, W)
    return path_penalty, path_mean, path_lengths, fake_img


if __name__ == "__main__":
    key = jax.random.PRNGKey(0)
    k_lat, k_w, k_noise = jax.random.split(key, 3)

    # num_batches handling from gen_path_regularizer (pl_batch_shrink=1, pl_batch_size=None)
    num_batches = N
    if PL_BATCH_SHRINK > 1:
        num_batches = max(1, num_batches // PL_BATCH_SHRINK)
    if PL_BATCH_SIZE is not None:
        num_batches = PL_BATCH_SIZE
    assert num_batches == N

    # deterministic inputs / parameters (generator weights stored in bf16, realistic on TPU)
    latents = jax.random.normal(k_lat, (N, L, D), dtype=jnp.float32)
    gen_weight = (jax.random.normal(k_w, (LD, CHW), dtype=jnp.float32)
                  / np.sqrt(LD)).astype(jnp.bfloat16)
    # noise = randn_like(fake_img) / sqrt(H*W)
    noise_img = jax.random.normal(k_noise, (N, C, H, W), dtype=jnp.float32) / np.sqrt(H * W)
    mean_path_length = jnp.array(0.0, dtype=jnp.float32)

    run = jax.jit(generator_path_regularizer)
    pen, pmean, plen, fake_img = run(latents, gen_weight, noise_img, mean_path_length)
    jax.block_until_ready((pen, pmean, plen, fake_img))

    ref_pen, ref_pmean, ref_plen, ref_fake = _reference(latents, gen_weight, noise_img,
                                                        mean_path_length)
    np.testing.assert_allclose(np.asarray(plen), np.asarray(ref_plen),
                               rtol=5e-3, atol=1e-4)
    np.testing.assert_allclose(np.asarray(pmean), np.asarray(ref_pmean),
                               rtol=5e-3, atol=1e-5)
    np.testing.assert_allclose(np.asarray(pen), np.asarray(ref_pen),
                               rtol=1e-2, atol=1e-5)
    # fake_img is emitted in bf16 (half the writeback); compare in f32 at bf16 tolerance.
    np.testing.assert_allclose(np.asarray(fake_img.astype(jnp.float32)),
                               np.asarray(ref_fake),
                               rtol=2e-2, atol=2e-2)

    print("KERNEL_OK")
</pallas_src>

<mosaic_0001>
module attributes {stable_mosaic.version = 11 : i64} {
  func.func @_path_reg_kernel(%arg0: i32, %arg1: memref<1xf32, #tpu.memory_space<smem>>, %arg2: memref<2x256xf32, #tpu.memory_space<vmem>>, %arg3: memref<256x1024xbf16, #tpu.memory_space<vmem>>, %arg4: memref<2x1024xf32, #tpu.memory_space<vmem>>, %arg5: memref<2x1024xbf16, #tpu.memory_space<vmem>>, %arg6: memref<1x128xf32, #tpu.memory_space<vmem>>) attributes {dimension_semantics = [#tpu.dimension_semantics<arbitrary>], iteration_bounds = array<i64: 1>, scalar_prefetch = 0 : i64, scratch_operands = 0 : i64, tpu.core_type = #tpu.core_type<tc>, window_params = [{transform_indices = @transform_0, window_bounds = array<i64: 1>}, {pipeline_mode = #tpu.pipeline_mode<synchronous>, transform_indices = @transform_1, window_bounds = array<i64: 2, 256>}, {pipeline_mode = #tpu.pipeline_mode<synchronous>, transform_indices = @transform_2, window_bounds = array<i64: 256, 1024>}, {pipeline_mode = #tpu.pipeline_mode<synchronous>, transform_indices = @transform_3, window_bounds = array<i64: 2, 1024>}, {pipeline_mode = #tpu.pipeline_mode<synchronous>, transform_indices = @transform_4, window_bounds = array<i64: 2, 1024>}, {pipeline_mode = #tpu.pipeline_mode<synchronous>, transform_indices = @transform_5, window_bounds = array<i64: 1, 128>}]} {
    %c0 = arith.constant 0 : index
    %c0_0 = arith.constant 0 : index
    %0 = vector.load %arg2[%c0, %c0_0] : memref<2x256xf32, #tpu.memory_space<vmem>>, vector<2x256xf32>
    %1 = arith.truncf %0 : vector<2x256xf32> to vector<2x256xbf16>
    %c0_1 = arith.constant 0 : index
    %c0_2 = arith.constant 0 : index
    %2 = vector.load %arg3[%c0_1, %c0_2] : memref<256x1024xbf16, #tpu.memory_space<vmem>>, vector<256x1024xbf16>
    %c0_3 = arith.constant 0 : index
    %c0_4 = arith.constant 0 : index
    %3 = vector.load %arg4[%c0_3, %c0_4] : memref<2x1024xf32, #tpu.memory_space<vmem>>, vector<2x1024xf32>
    %4 = arith.truncf %3 : vector<2x1024xf32> to vector<2x1024xbf16>
    %cst = arith.constant dense<0.000000e+00> : vector<2x1024xf32>
    %5 = tpu.matmul %1, %2, %cst {dimension_numbers = #tpu.dot_dimension_numbers<[1], [0], [0], [1], [0, 0, 1, 1], [], []>} : vector<2x256xbf16>, vector<256x1024xbf16>, vector<2x1024xf32> -> vector<2x1024xf32>
    %6 = arith.truncf %5 : vector<2x1024xf32> to vector<2x1024xbf16>
    %c0_5 = arith.constant 0 : index
    %c0_6 = arith.constant 0 : index
    %7 = vector.load %arg5[%c0_5, %c0_6] : memref<2x1024xbf16, #tpu.memory_space<vmem>>, vector<2x1024xbf16>
    tpu.vector_store %arg5[%c0_5, %c0_6], %6 {strides = array<i32>} : memref<2x1024xbf16, #tpu.memory_space<vmem>>, vector<2x1024xbf16>,
    %cst_7 = arith.constant dense<0.000000e+00> : vector<256x2xf32>
    %8 = tpu.matmul %2, %4, %cst_7 {dimension_numbers = #tpu.dot_dimension_numbers<[1], [1], [0], [0], [0, 0, 1, 0], [], []>} : vector<256x1024xbf16>, vector<2x1024xbf16>, vector<256x2xf32> -> vector<256x2xf32>
    %9 = arith.mulf %8, %8 : vector<256x2xf32>
    %cst_8 = arith.constant dense<0.000000e+00> : vector<2xf32>
    %10 = vector.multi_reduction <add>, %9, %cst_8 [0] : vector<256x2xf32> to vector<2xf32>
    %11 = vector.shape_cast %10 : vector<2xf32> to vector<1x2xf32>
    %cst_9 = arith.constant 1.250000e-01 : f32
    %12 = vector.broadcast %cst_9 : f32 to vector<1x2xf32>
    %13 = arith.mulf %11, %12 : vector<1x2xf32>
    %14 = math.sqrt %13 : vector<1x2xf32>
    %15 = vector.shape_cast %14 : vector<1x2xf32> to vector<1x1x2xf32>
    %cst_10 = arith.constant dense<0.000000e+00> : vector<1xf32>
    %16 = vector.multi_reduction <add>, %15, %cst_10 [1, 2] : vector<1x1x2xf32> to vector<1xf32>
    %17 = vector.shape_cast %16 : vector<1xf32> to vector<1x1x1xf32>
    %18 = vector.extract %17[0, 0, 0] : f32 from vector<1x1x1xf32>
    %cst_11 = arith.constant 5.000000e-01 : f32
    %19 = arith.mulf %18, %cst_11 : f32
    %c0_12 = arith.constant 0 : index
    %20 = memref.load %arg1[%c0_12] : memref<1xf32, #tpu.memory_space<smem>>
    %21 = arith.subf %19, %20 : f32
    %cst_13 = arith.constant 0.00999999977 : f32
    %22 = arith.mulf %cst_13, %21 : f32
    %23 = arith.addf %20, %22 : f32
    %24 = vector.broadcast %23 : f32 to vector<1x2xf32>
    %25 = arith.subf %14, %24 : vector<1x2xf32>
    %26 = arith.mulf %25, %25 : vector<1x2xf32>
    %27 = vector.shape_cast %26 : vector<1x2xf32> to vector<1x1x2xf32>
    %cst_14 = arith.constant dense<0.000000e+00> : vector<1xf32>
    %28 = vector.multi_reduction <add>, %27, %cst_14 [1, 2] : vector<1x1x2xf32> to vector<1xf32>
    %29 = vector.shape_cast %28 : vector<1xf32> to vector<1x1x1xf32>
    %30 = vector.extract %29[0, 0, 0] : f32 from vector<1x1x1xf32>
    %cst_15 = arith.constant 5.000000e-01 : f32
    %31 = arith.mulf %30, %cst_15 : f32
    %32 = tpu.iota {dimensions = array<i32: 1>} : vector<1x128xi32>
    %c126_i32 = arith.constant 126 : i32
    %33 = vector.broadcast %c126_i32 : i32 to vector<1x128xi32>
    %34 = arith.cmpi eq, %32, %33 : vector<1x128xi32>
    %c127_i32 = arith.constant 127 : i32
    %35 = vector.broadcast %c127_i32 : i32 to vector<1x128xi32>
    %36 = arith.cmpi eq, %32, %35 : vector<1x128xi32>
    %cst_16 = arith.constant 0.000000e+00 : f32
    %37 = vector.broadcast %31 : f32 to vector<1x128xf32>
    %38 = vector.broadcast %cst_16 : f32 to vector<1x128xf32>
    %39 = arith.select %36, %37, %38 : vector<1x128xi1>, vector<1x128xf32>
    %40 = vector.broadcast %23 : f32 to vector<1x128xf32>
    %41 = arith.select %34, %40, %39 : vector<1x128xi1>, vector<1x128xf32>
    %cst_17 = arith.constant 0.000000e+00 : f32
    %42 = vector.broadcast %cst_17 : f32 to vector<1x126xf32>
    %43 = tpu.concatenate %14, %42 in 1 : vector<1x2xf32>, vector<1x126xf32> -> vector<1x128xf32>
    %44 = arith.addf %43, %41 : vector<1x128xf32>
    %c0_18 = arith.constant 0 : index
    %c0_19 = arith.constant 0 : index
    %45 = vector.load %arg6[%c0_18, %c0_19] : memref<1x128xf32, #tpu.memory_space<vmem>>, vector<1x128xf32>
    tpu.vector_store %arg6[%c0_18, %c0_19], %44 {strides = array<i32>} : memref<1x128xf32, #tpu.memory_space<vmem>>, vector<1x128xf32>,
    return
  }
  func.func @transform_0(%arg0: i32) -> i32 {
    %c0_i32 = arith.constant 0 : i32
    %c0_i32_0 = arith.constant 0 : i32
    return %c0_i32 : i32
  }
  func.func @transform_1(%arg0: i32) -> (i32, i32) {
    %c0_i32 = arith.constant 0 : i32
    %c0_i32_0 = arith.constant 0 : i32
    %c0_i32_1 = arith.constant 0 : i32
    return %c0_i32, %c0_i32_0 : i32, i32
  }
  func.func @transform_2(%arg0: i32) -> (i32, i32) {
    %c0_i32 = arith.constant 0 : i32
    %c0_i32_0 = arith.constant 0 : i32
    %c0_i32_1 = arith.constant 0 : i32
    return %c0_i32, %c0_i32_0 : i32, i32
  }
  func.func @transform_3(%arg0: i32) -> (i32, i32) {
    %c0_i32 = arith.constant 0 : i32
    %c0_i32_0 = arith.constant 0 : i32
    %c0_i32_1 = arith.constant 0 : i32
    return %c0_i32, %c0_i32_0 : i32, i32
  }
  func.func @transform_4(%arg0: i32) -> (i32, i32) {
    %c0_i32 = arith.constant 0 : i32
    %c0_i32_0 = arith.constant 0 : i32
    %c0_i32_1 = arith.constant 0 : i32
    return %c0_i32, %c0_i32_0 : i32, i32
  }
  func.func @transform_5(%arg0: i32) -> (i32, i32) {
    %c0_i32 = arith.constant 0 : i32
    %c0_i32_0 = arith.constant 0 : i32
    %c0_i32_1 = arith.constant 0 : i32
    return %c0_i32, %c0_i32_0 : i32, i32
  }
}

</mosaic_0001>

<llo_original>
// kernel: generator_path_regularizer.1
$region0: #{generator_path_regularizer.1}
  #allocation0 [shape = 'u32[]', space=smem, size = 0x4, offset = 0x4, fixed_abs, tag = 'smem constant byte address 0x4 - core index']
  #allocation1 [shape = 'u32[72,128]{1,0:T(1,128)}', space=vmem, size = 0x9000, scoped, tag = 'internal scratch']
  #allocation2 [shape = 'f32[1]{0:T(128)S(6)}', space=smem, size = 0x200, scoped, tag = 'scoped memory for generator_path_regularizer.1']
  %s0 = inlined_call_operand.<no memory space> [shape: f32[1], index: 0, kind: input, shape index: {}]
  %s1 = inlined_call_operand.vmem [shape: f32[2,256], index: 1, kind: input, shape index: {}]
  %s2 = inlined_call_operand.hbm [shape: bf16[256,1024], index: 2, kind: input, shape index: {}]
  %s3 = inlined_call_operand.vmem [shape: f32[2,1024], index: 3, kind: input, shape index: {}]
  %s4 = inlined_call_operand.vmem [shape: bf16[2,1024], index: 4, kind: output, shape index: {0}]
  %s5 = inlined_call_operand.vmem [shape: f32[1,128], index: 5, kind: output, shape index: {1}]
  %6 = xla_tuple %s4, %s5
  %s7 = sld [smem:[#allocation0]]
  $region38: #{generator_path_regularizer.1} parent=0
    _
  %s9 = ssub.s32 1, %s7
  %s10 = scalar_select 0, %s9, %s7
  %11 = sst [smem:[#allocation2]] %s0
  $region1: #{generator_path_regularizer.1} parent=0
    #allocation3 [shape = 'u8[524288]{0}', space=vmem, size = 0x80000, scoped, tag = 'input window, operand 2, single buffered']
    #allocation4 [shape = 's32[1]{0}', space=sflag, size = 0x4, scoped, tag = 'scoped memory for generator_path_regularizer.1']
    %12 = vsyncpa [#allocation4], 0
    // Predicated region
    $region2: #{generator_path_regularizer.1} parent=1 // pred_check
      _
    $region3: #{generator_path_regularizer.1} parent=1 // pred_check_branch
      %14 = sbr.rel (0) target = $region5
    $region4: #{generator_path_regularizer.1} parent=1 // pred_region
      _
    $region5: #{generator_path_regularizer.1} parent=1 // pred_fallthru
      _
    // Predicated region
    $region6: #{generator_path_regularizer.1} parent=1 // pred_check
      _
    $region7: #{generator_path_regularizer.1} parent=1 // pred_check_branch
      %16 = sbr.rel (0) target = $region9
    $region8: #{generator_path_regularizer.1} parent=1 // pred_region
      _
    $region9: #{generator_path_regularizer.1} parent=1 // pred_fallthru
      _
    // Predicated region
    $region10: #{generator_path_regularizer.1} parent=1 // pred_check
      _
    $region11: #{generator_path_regularizer.1} parent=1 // pred_check_branch
      %18 = sbr.rel (0) target = $region13
    $region12: #{generator_path_regularizer.1} parent=1 // pred_region
      %20 = vsyncadd [#allocation4], 0
      %s21 = sshll.u32 %s2, 4
      %s22 = int_to_ptr.hbm [resolvable:$true] %s21
      %s23 = sshll.u32 [#allocation3], 4
      %s24 = int_to_ptr.vmem [resolvable:$true] %s23
      %29 = dma.hbm_to_vmem [thread:$0]  %s22, 16384, %s24, [#allocation4], 512, 512, 32
    $region13: #{generator_path_regularizer.1} parent=1 // pred_fallthru
      _
    // Predicated region
    $region14: #{generator_path_regularizer.1} parent=1 // pred_check
      _
    $region15: #{generator_path_regularizer.1} parent=1 // pred_check_branch
      %31 = sbr.rel (0) target = $region17
    $region16: #{generator_path_regularizer.1} parent=1 // pred_region
      _
    $region17: #{generator_path_regularizer.1} parent=1 // pred_fallthru
      _
    // Predicated region
    $region18: #{generator_path_regularizer.1} parent=1 // pred_check
      _
    $region19: #{generator_path_regularizer.1} parent=1 // pred_check_branch
      %33 = sbr.rel (0) target = $region21
    $region20: #{generator_path_regularizer.1} parent=1 // pred_region
      %35 = dma.done [#allocation4], 16384
    $region21: #{generator_path_regularizer.1} parent=1 // pred_fallthru
      _
    %v37 = vld [vmem:[%s1] sm:$0xf]
    %39 = vst [vmem:[#allocation1] ss:$4 sm:$0xff] %v37
    %v40 = vld.sshfl [vmem:[#allocation1] sm:$0xff pattern:$0x73625140]
    %v41 = vld.sshfl [vmem:[#allocation1 + $0x8] sm:$0xff pattern:$0x73625140]
    %v44 = vpack.c.bf16 %v40, %v40
    %v45 = vpack.c.bf16 %v41, %v41
    %v46 = vld [vmem:[#allocation3] sm:$0xff]
    %v47 = vld [vmem:[#allocation3 + $0x8] sm:$0xff]
    %v48 = vld [vmem:[#allocation3 + $0x10] sm:$0xff]
    %v49 = vld [vmem:[#allocation3 + $0x18] sm:$0xff]
    %v50 = vld [vmem:[#allocation3 + $0x20] sm:$0xff]
    %v51 = vld [vmem:[#allocation3 + $0x28] sm:$0xff]
    %v52 = vld [vmem:[#allocation3 + $0x30] sm:$0xff]
    %v53 = vld [vmem:[#allocation3 + $0x38] sm:$0xff]
    %v54 = vld [vmem:[#allocation3 + $0x40] sm:$0xff]
    %v55 = vld [vmem:[#allocation3 + $0x48] sm:$0xff]
    %v56 = vld [vmem:[#allocation3 + $0x50] sm:$0xff]
    %v57 = vld [vmem:[#allocation3 + $0x58] sm:$0xff]
    %v58 = vld [vmem:[#allocation3 + $0x60] sm:$0xff]
    %v59 = vld [vmem:[#allocation3 + $0x68] sm:$0xff]
    %v60 = vld [vmem:[#allocation3 + $0x70] sm:$0xff]
    %v61 = vld [vmem:[#allocation3 + $0x78] sm:$0xff]
    %v62 = vld [vmem:[#allocation3 + $0x80] sm:$0xff]
    %v63 = vld [vmem:[#allocation3 + $0x88] sm:$0xff]
    %v64 = vld [vmem:[#allocation3 + $0x90] sm:$0xff]
    %v65 = vld [vmem:[#allocation3 + $0x98] sm:$0xff]
    %v66 = vld [vmem:[#allocation3 + $0xa0] sm:$0xff]
    %v67 = vld [vmem:[#allocation3 + $0xa8] sm:$0xff]
    %v68 = vld [vmem:[#allocation3 + $0xb0] sm:$0xff]
    %v69 = vld [vmem:[#allocation3 + $0xb8] sm:$0xff]
    %v70 = vld [vmem:[#allocation3 + $0xc0] sm:$0xff]
    %v71 = vld [vmem:[#allocation3 + $0xc8] sm:$0xff]
    %v72 = vld [vmem:[#allocation3 + $0xd0] sm:$0xff]
    %v73 = vld [vmem:[#allocation3 + $0xd8] sm:$0xff]
    %v74 = vld [vmem:[#allocation3 + $0xe0] sm:$0xff]
    %v75 = vld [vmem:[#allocation3 + $0xe8] sm:$0xff]
    %v76 = vld [vmem:[#allocation3 + $0xf0] sm:$0xff]
    %v77 = vld [vmem:[#allocation3 + $0xf8] sm:$0xff]
    %v78 = vld [vmem:[#allocation3 + $0x100] sm:$0xff]
    %v79 = vld [vmem:[#allocation3 + $0x108] sm:$0xff]
    %v80 = vld [vmem:[#allocation3 + $0x110] sm:$0xff]
    %v81 = vld [vmem:[#allocation3 + $0x118] sm:$0xff]
    %v82 = vld [vmem:[#allocation3 + $0x120] sm:$0xff]
    %v83 = vld [vmem:[#allocation3 + $0x128] sm:$0xff]
    %v84 = vld [vmem:[#allocation3 + $0x130] sm:$0xff]
    %v85 = vld [vmem:[#allocation3 + $0x138] sm:$0xff]
    %v86 = vld [vmem:[#allocation3 + $0x140] sm:$0xff]
    %v87 = vld [vmem:[#allocation3 + $0x148] sm:$0xff]
    %v88 = vld [vmem:[#allocation3 + $0x150] sm:$0xff]
    %v89 = vld [vmem:[#allocation3 + $0x158] sm:$0xff]
    %v90 = vld [vmem:[#allocation3 + $0x160] sm:$0xff]
    %v91 = vld [vmem:[#allocation3 + $0x168] sm:$0xff]
    %v92 = vld [vmem:[#allocation3 + $0x170] sm:$0xff]
    %v93 = vld [vmem:[#allocation3 + $0x178] sm:$0xff]
    %v94 = vld [vmem:[#allocation3 + $0x180] sm:$0xff]
    %v95 = vld [vmem:[#allocation3 + $0x188] sm:$0xff]
    %v96 = vld [vmem:[#allocation3 + $0x190] sm:$0xff]
    %v97 = vld [vmem:[#allocation3 + $0x198] sm:$0xff]
    %v98 = vld [vmem:[#allocation3 + $0x1a0] sm:$0xff]
    %v99 = vld [vmem:[#allocation3 + $0x1a8] sm:$0xff]
    %v100 = vld [vmem:[#allocation3 + $0x1b0] sm:$0xff]
    %v101 = vld [vmem:[#allocation3 + $0x1b8] sm:$0xff]
    %v102 = vld [vmem:[#allocation3 + $0x1c0] sm:$0xff]
    %v103 = vld [vmem:[#allocation3 + $0x1c8] sm:$0xff]
    %v104 = vld [vmem:[#allocation3 + $0x1d0] sm:$0xff]
    %v105 = vld [vmem:[#allocation3 + $0x1d8] sm:$0xff]
    %v106 = vld [vmem:[#allocation3 + $0x1e0] sm:$0xff]
    %v107 = vld [vmem:[#allocation3 + $0x1e8] sm:$0xff]
    %v108 = vld [vmem:[#allocation3 + $0x1f0] sm:$0xff]
    %v109 = vld [vmem:[#allocation3 + $0x1f8] sm:$0xff]
    %v110 = vld [vmem:[#allocation3 + $0x200] sm:$0xff]
    %v111 = vld [vmem:[#allocation3 + $0x208] sm:$0xff]
    %v112 = vld [vmem:[#allocation3 + $0x210] sm:$0xff]
    %v113 = vld [vmem:[#allocation3 + $0x218] sm:$0xff]
    %v114 = vld [vmem:[#allocation3 + $0x220] sm:$0xff]
    %v115 = vld [vmem:[#allocation3 + $0x228] sm:$0xff]
    %v116 = vld [vmem:[#allocation3 + $0x230] sm:$0xff]
    %v117 = vld [vmem:[#allocation3 + $0x238] sm:$0xff]
    %v118 = vld [vmem:[#allocation3 + $0x240] sm:$0xff]
    %v119 = vld [vmem:[#allocation3 + $0x248] sm:$0xff]
    %v120 = vld [vmem:[#allocation3 + $0x250] sm:$0xff]
    %v121 = vld [vmem:[#allocation3 + $0x258] sm:$0xff]
    %v122 = vld [vmem:[#allocation3 + $0x260] sm:$0xff]
    %v123 = vld [vmem:[#allocation3 + $0x268] sm:$0xff]
    %v124 = vld [vmem:[#allocation3 + $0x270] sm:$0xff]
    %v125 = vld [vmem:[#allocation3 + $0x278] sm:$0xff]
    %v126 = vld [vmem:[#allocation3 + $0x280] sm:$0xff]
    %v127 = vld [vmem:[#allocation3 + $0x288] sm:$0xff]
    %v128 = vld [vmem:[#allocation3 + $0x290] sm:$0xff]
    %v129 = vld [vmem:[#allocation3 + $0x298] sm:$0xff]
    %v130 = vld [vmem:[#allocation3 + $0x2a0] sm:$0xff]
    %v131 = vld [vmem:[#allocation3 + $0x2a8] sm:$0xff]
    %v132 = vld [vmem:[#allocation3 + $0x2b0] sm:$0xff]
    %v133 = vld [vmem:[#allocation3 + $0x2b8] sm:$0xff]
    %v134 = vld [vmem:[#allocation3 + $0x2c0] sm:$0xff]
    %v135 = vld [vmem:[#allocation3 + $0x2c8] sm:$0xff]
    %v136 = vld [vmem:[#allocation3 + $0x2d0] sm:$0xff]
    %v137 = vld [vmem:[#allocation3 + $0x2d8] sm:$0xff]
    %v138 = vld [vmem:[#allocation3 + $0x2e0] sm:$0xff]
    %v139 = vld [vmem:[#allocation3 + $0x2e8] sm:$0xff]
    %v140 = vld [vmem:[#allocation3 + $0x2f0] sm:$0xff]
    %v141 = vld [vmem:[#allocation3 + $0x2f8] sm:$0xff]
    %v142 = vld [vmem:[#allocation3 + $0x300] sm:$0xff]
    %v143 = vld [vmem:[#allocation3 + $0x308] sm:$0xff]
    %v144 = vld [vmem:[#allocation3 + $0x310] sm:$0xff]
    %v145 = vld [vmem:[#allocation3 + $0x318] sm:$0xff]
    %v146 = vld [vmem:[#allocation3 + $0x320] sm:$0xff]
    %v147 = vld [vmem:[#allocation3 + $0x328] sm:$0xff]
    %v148 = vld [vmem:[#allocation3 + $0x330] sm:$0xff]
    %v149 = vld [vmem:[#allocation3 + $0x338] sm:$0xff]
    %v150 = vld [vmem:[#allocation3 + $0x340] sm:$0xff]
    %v151 = vld [vmem:[#allocation3 + $0x348] sm:$0xff]
    %v152 = vld [vmem:[#allocation3 + $0x350] sm:$0xff]
    %v153 = vld [vmem:[#allocation3 + $0x358] sm:$0xff]
    %v154 = vld [vmem:[#allocation3 + $0x360] sm:$0xff]
    %v155 = vld [vmem:[#allocation3 + $0x368] sm:$0xff]
    %v156 = vld [vmem:[#allocation3 + $0x370] sm:$0xff]
    %v157 = vld [vmem:[#allocation3 + $0x378] sm:$0xff]
    %v158 = vld [vmem:[#allocation3 + $0x380] sm:$0xff]
    %v159 = vld [vmem:[#allocation3 + $0x388] sm:$0xff]
    %v160 = vld [vmem:[#allocation3 + $0x390] sm:$0xff]
    %v161 = vld [vmem:[#allocation3 + $0x398] sm:$0xff]
    %v162 = vld [vmem:[#allocation3 + $0x3a0] sm:$0xff]
    %v163 = vld [vmem:[#allocation3 + $0x3a8] sm:$0xff]
    %v164 = vld [vmem:[#allocation3 + $0x3b0] sm:$0xff]
    %v165 = vld [vmem:[#allocation3 + $0x3b8] sm:$0xff]
    %v166 = vld [vmem:[#allocation3 + $0x3c0] sm:$0xff]
    %v167 = vld [vmem:[#allocation3 + $0x3c8] sm:$0xff]
    %v168 = vld [vmem:[#allocation3 + $0x3d0] sm:$0xff]
    %v169 = vld [vmem:[#allocation3 + $0x3d8] sm:$0xff]
    %v170 = vld [vmem:[#allocation3 + $0x3e0] sm:$0xff]
    %v171 = vld [vmem:[#allocation3 + $0x3e8] sm:$0xff]
    %v172 = vld [vmem:[#allocation3 + $0x3f0] sm:$0xff]
    %v173 = vld [vmem:[#allocation3 + $0x3f8] sm:$0xff]
    %v174 = vld [vmem:[%s3] sm:$0xff]
    %v175 = vld [vmem:[%s3 + $0x8] sm:$0xff]
    %178 = vst [vmem:[#allocation1] ss:$4 sm:$0xff] %v174
    %s179 = scalar_lea.vmem [#allocation1], 32
    %180 = vst [vmem:[%s179] ss:$4 sm:$0xff] %v175
    %v181 = vld.sshfl [vmem:[#allocation1] sm:$0xff pattern:$0x73625140]
    %v182 = vld.sshfl [vmem:[#allocation1 + $0x8] sm:$0xff pattern:$0x73625140]
    %v183 = vld.sshfl [vmem:[#allocation1 + $0x10] sm:$0xff pattern:$0x73625140]
    %v184 = vld.sshfl [vmem:[#allocation1 + $0x18] sm:$0xff pattern:$0x73625140]
    %v185 = vld.sshfl [vmem:[#allocation1 + $0x20] sm:$0xff pattern:$0x73625140]
    %v186 = vld.sshfl [vmem:[#allocation1 + $0x28] sm:$0xff pattern:$0x73625140]
    %v187 = vld.sshfl [vmem:[#allocation1 + $0x30] sm:$0xff pattern:$0x73625140]
    %v188 = vld.sshfl [vmem:[#allocation1 + $0x38] sm:$0xff pattern:$0x73625140]
    %v197 = vpack.c.bf16 %v181, %v181
    %v198 = vpack.c.bf16 %v182, %v182
    %v199 = vpack.c.bf16 %v183, %v183
    %v200 = vpack.c.bf16 %v184, %v184
    %v201 = vpack.c.bf16 %v185, %v185
    %v202 = vpack.c.bf16 %v186, %v186
    %v203 = vpack.c.bf16 %v187, %v187
    %v204 = vpack.c.bf16 %v188, %v188
    %v333 = vunpack.c.l.b16 %v46
    %v334 = vunpack.c.h.b16 %v46
    %v335 = vunpack.c.l.b16 %v47
    %v336 = vunpack.c.h.b16 %v47
    %v337 = vunpack.c.l.b16 %v48
    %v338 = vunpack.c.h.b16 %v48
    %v339 = vunpack.c.l.b16 %v49
    %v340 = vunpack.c.h.b16 %v49
    %v341 = vunpack.c.l.b16 %v50
    %v342 = vunpack.c.h.b16 %v50
    %v343 = vunpack.c.l.b16 %v51
    %v344 = vunpack.c.h.b16 %v51
    %v345 = vunpack.c.l.b16 %v52
    %v346 = vunpack.c.h.b16 %v52
    %v347 = vunpack.c.l.b16 %v53
    %v348 = vunpack.c.h.b16 %v53
    %v349 = vunpack.c.l.b16 %v54
    %v350 = vunpack.c.h.b16 %v54
    %v351 = vunpack.c.l.b16 %v55
    %v352 = vunpack.c.h.b16 %v55
    %v353 = vunpack.c.l.b16 %v56
    %v354 = vunpack.c.h.b16 %v56
    %v355 = vunpack.c.l.b16 %v57
    %v356 = vunpack.c.h.b16 %v57
    %v357 = vunpack.c.l.b16 %v58
    %v358 = vunpack.c.h.b16 %v58
    %v359 = vunpack.c.l.b16 %v59
    %v360 = vunpack.c.h.b16 %v59
    %v361 = vunpack.c.l.b16 %v60
    %v362 = vunpack.c.h.b16 %v60
    %v363 = vunpack.c.l.b16 %v61
    %v364 = vunpack.c.h.b16 %v61
    %v365 = vunpack.c.l.b16 %v62
    %v366 = vunpack.c.h.b16 %v62
    %v367 = vunpack.c.l.b16 %v63
    %v368 = vunpack.c.h.b16 %v63
    %v369 = vunpack.c.l.b16 %v64
    %v370 = vunpack.c.h.b16 %v64
    %v371 = vunpack.c.l.b16 %v65
    %v372 = vunpack.c.h.b16 %v65
    %v373 = vunpack.c.l.b16 %v66
    %v374 = vunpack.c.h.b16 %v66
    %v375 = vunpack.c.l.b16 %v67
    %v376 = vunpack.c.h.b16 %v67
    %v377 = vunpack.c.l.b16 %v68
    %v378 = vunpack.c.h.b16 %v68
    %v379 = vunpack.c.l.b16 %v69
    %v380 = vunpack.c.h.b16 %v69
    %v381 = vunpack.c.l.b16 %v70
    %v382 = vunpack.c.h.b16 %v70
    %v383 = vunpack.c.l.b16 %v71
    %v384 = vunpack.c.h.b16 %v71
    %v385 = vunpack.c.l.b16 %v72
    %v386 = vunpack.c.h.b16 %v72
    %v387 = vunpack.c.l.b16 %v73
    %v388 = vunpack.c.h.b16 %v73
    %v389 = vunpack.c.l.b16 %v74
    %v390 = vunpack.c.h.b16 %v74
    %v391 = vunpack.c.l.b16 %v75
    %v392 = vunpack.c.h.b16 %v75
    %v393 = vunpack.c.l.b16 %v76
    %v394 = vunpack.c.h.b16 %v76
    %v395 = vunpack.c.l.b16 %v77
    %v396 = vunpack.c.h.b16 %v77
    %v397 = vunpack.c.l.b16 %v78
    %v398 = vunpack.c.h.b16 %v78
    %v399 = vunpack.c.l.b16 %v79
    %v400 = vunpack.c.h.b16 %v79
    %v401 = vunpack.c.l.b16 %v80
    %v402 = vunpack.c.h.b16 %v80
    %v403 = vunpack.c.l.b16 %v81
    %v404 = vunpack.c.h.b16 %v81
    %v405 = vunpack.c.l.b16 %v82
    %v406 = vunpack.c.h.b16 %v82
    %v407 = vunpack.c.l.b16 %v83
    %v408 = vunpack.c.h.b16 %v83
    %v409 = vunpack.c.l.b16 %v84
    %v410 = vunpack.c.h.b16 %v84
    %v411 = vunpack.c.l.b16 %v85
    %v412 = vunpack.c.h.b16 %v85
    %v413 = vunpack.c.l.b16 %v86
    %v414 = vunpack.c.h.b16 %v86
    %v415 = vunpack.c.l.b16 %v87
    %v416 = vunpack.c.h.b16 %v87
    %v417 = vunpack.c.l.b16 %v88
    %v418 = vunpack.c.h.b16 %v88
    %v419 = vunpack.c.l.b16 %v89
    %v420 = vunpack.c.h.b16 %v89
    %v421 = vunpack.c.l.b16 %v90
    %v422 = vunpack.c.h.b16 %v90
    %v423 = vunpack.c.l.b16 %v91
    %v424 = vunpack.c.h.b16 %v91
    %v425 = vunpack.c.l.b16 %v92
    %v426 = vunpack.c.h.b16 %v92
    %v427 = vunpack.c.l.b16 %v93
    %v428 = vunpack.c.h.b16 %v93
    %v429 = vunpack.c.l.b16 %v94
    %v430 = vunpack.c.h.b16 %v94
    %v431 = vunpack.c.l.b16 %v95
    %v432 = vunpack.c.h.b16 %v95
    %v433 = vunpack.c.l.b16 %v96
    %v434 = vunpack.c.h.b16 %v96
    %v435 = vunpack.c.l.b16 %v97
    %v436 = vunpack.c.h.b16 %v97
    %v437 = vunpack.c.l.b16 %v98
    %v438 = vunpack.c.h.b16 %v98
    %v439 = vunpack.c.l.b16 %v99
    %v440 = vunpack.c.h.b16 %v99
    %v441 = vunpack.c.l.b16 %v100
    %v442 = vunpack.c.h.b16 %v100
    %v443 = vunpack.c.l.b16 %v101
    %v444 = vunpack.c.h.b16 %v101
    %v445 = vunpack.c.l.b16 %v102
    %v446 = vunpack.c.h.b16 %v102
    %v447 = vunpack.c.l.b16 %v103
    %v448 = vunpack.c.h.b16 %v103
    %v449 = vunpack.c.l.b16 %v104
    %v450 = vunpack.c.h.b16 %v104
    %v451 = vunpack.c.l.b16 %v105
    %v452 = vunpack.c.h.b16 %v105
    %v453 = vunpack.c.l.b16 %v106
    %v454 = vunpack.c.h.b16 %v106
    %v455 = vunpack.c.l.b16 %v107
    %v456 = vunpack.c.h.b16 %v107
    %v457 = vunpack.c.l.b16 %v108
    %v458 = vunpack.c.h.b16 %v108
    %v459 = vunpack.c.l.b16 %v109
    %v460 = vunpack.c.h.b16 %v109
    %v461 = vunpack.c.l.b16 %v110
    %v462 = vunpack.c.h.b16 %v110
    %v463 = vunpack.c.l.b16 %v111
    %v464 = vunpack.c.h.b16 %v111
    %v465 = vunpack.c.l.b16 %v112
    %v466 = vunpack.c.h.b16 %v112
    %v467 = vunpack.c.l.b16 %v113
    %v468 = vunpack.c.h.b16 %v113
    %v469 = vunpack.c.l.b16 %v114
    %v470 = vunpack.c.h.b16 %v114
    %v471 = vunpack.c.l.b16 %v115
    %v472 = vunpack.c.h.b16 %v115
    %v473 = vunpack.c.l.b16 %v116
    %v474 = vunpack.c.h.b16 %v116
    %v475 = vunpack.c.l.b16 %v117
    %v476 = vunpack.c.h.b16 %v117
    %v477 = vunpack.c.l.b16 %v118
    %v478 = vunpack.c.h.b16 %v118
    %v479 = vunpack.c.l.b16 %v119
    %v480 = vunpack.c.h.b16 %v119
    %v481 = vunpack.c.l.b16 %v120
    %v482 = vunpack.c.h.b16 %v120
    %v483 = vunpack.c.l.b16 %v121
    %v484 = vunpack.c.h.b16 %v121
    %v485 = vunpack.c.l.b16 %v122
    %v486 = vunpack.c.h.b16 %v122
    %v487 = vunpack.c.l.b16 %v123
    %v488 = vunpack.c.h.b16 %v123
    %v489 = vunpack.c.l.b16 %v124
    %v490 = vunpack.c.h.b16 %v124
    %v491 = vunpack.c.l.b16 %v125
    %v492 = vunpack.c.h.b16 %v125
    %v493 = vunpack.c.l.b16 %v126
    %v494 = vunpack.c.h.b16 %v126
    %v495 = vunpack.c.l.b16 %v127
    %v496 = vunpack.c.h.b16 %v127
    %v497 = vunpack.c.l.b16 %v128
    %v498 = vunpack.c.h.b16 %v128
    %v499 = vunpack.c.l.b16 %v129
    %v500 = vunpack.c.h.b16 %v129
    %v501 = vunpack.c.l.b16 %v130
    %v502 = vunpack.c.h.b16 %v130
    %v503 = vunpack.c.l.b16 %v131
    %v504 = vunpack.c.h.b16 %v131
    %v505 = vunpack.c.l.b16 %v132
    %v506 = vunpack.c.h.b16 %v132
    %v507 = vunpack.c.l.b16 %v133
    %v508 = vunpack.c.h.b16 %v133
    %v509 = vunpack.c.l.b16 %v134
    %v510 = vunpack.c.h.b16 %v134
    %v511 = vunpack.c.l.b16 %v135
    %v512 = vunpack.c.h.b16 %v135
    %v513 = vunpack.c.l.b16 %v136
    %v514 = vunpack.c.h.b16 %v136
    %v515 = vunpack.c.l.b16 %v137
    %v516 = vunpack.c.h.b16 %v137
    %v517 = vunpack.c.l.b16 %v138
    %v518 = vunpack.c.h.b16 %v138
    %v519 = vunpack.c.l.b16 %v139
    %v520 = vunpack.c.h.b16 %v139
    %v521 = vunpack.c.l.b16 %v140
    %v522 = vunpack.c.h.b16 %v140
    %v523 = vunpack.c.l.b16 %v141
    %v524 = vunpack.c.h.b16 %v141
    %v525 = vunpack.c.l.b16 %v142
    %v526 = vunpack.c.h.b16 %v142
    %v527 = vunpack.c.l.b16 %v143
    %v528 = vunpack.c.h.b16 %v143
    %v529 = vunpack.c.l.b16 %v144
    %v530 = vunpack.c.h.b16 %v144
    %v531 = vunpack.c.l.b16 %v145
    %v532 = vunpack.c.h.b16 %v145
    %v533 = vunpack.c.l.b16 %v146
    %v534 = vunpack.c.h.b16 %v146
    %v535 = vunpack.c.l.b16 %v147
    %v536 = vunpack.c.h.b16 %v147
    %v537 = vunpack.c.l.b16 %v148
    %v538 = vunpack.c.h.b16 %v148
    %v539 = vunpack.c.l.b16 %v149
    %v540 = vunpack.c.h.b16 %v149
    %v541 = vunpack.c.l.b16 %v150
    %v542 = vunpack.c.h.b16 %v150
    %v543 = vunpack.c.l.b16 %v151
    %v544 = vunpack.c.h.b16 %v151
    %v545 = vunpack.c.l.b16 %v152
    %v546 = vunpack.c.h.b16 %v152
    %v547 = vunpack.c.l.b16 %v153
    %v548 = vunpack.c.h.b16 %v153
    %v549 = vunpack.c.l.b16 %v154
    %v550 = vunpack.c.h.b16 %v154
    %v551 = vunpack.c.l.b16 %v155
    %v552 = vunpack.c.h.b16 %v155
    %v553 = vunpack.c.l.b16 %v156
    %v554 = vunpack.c.h.b16 %v156
    %v555 = vunpack.c.l.b16 %v157
    %v556 = vunpack.c.h.b16 %v157
    %v557 = vunpack.c.l.b16 %v158
    %v558 = vunpack.c.h.b16 %v158
    %v559 = vunpack.c.l.b16 %v159
    %v560 = vunpack.c.h.b16 %v159
    %v561 = vunpack.c.l.b16 %v160
    %v562 = vunpack.c.h.b16 %v160
    %v563 = vunpack.c.l.b16 %v161
    %v564 = vunpack.c.h.b16 %v161
    %v565 = vunpack.c.l.b16 %v162
    %v566 = vunpack.c.h.b16 %v162
    %v567 = vunpack.c.l.b16 %v163
    %v568 = vunpack.c.h.b16 %v163
    %v569 = vunpack.c.l.b16 %v164
    %v570 = vunpack.c.h.b16 %v164
    %v571 = vunpack.c.l.b16 %v165
    %v572 = vunpack.c.h.b16 %v165
    %v573 = vunpack.c.l.b16 %v166
    %v574 = vunpack.c.h.b16 %v166
    %v575 = vunpack.c.l.b16 %v167
    %v576 = vunpack.c.h.b16 %v167
    %v577 = vunpack.c.l.b16 %v168
    %v578 = vunpack.c.h.b16 %v168
    %v579 = vunpack.c.l.b16 %v169
    %v580 = vunpack.c.h.b16 %v169
    %v581 = vunpack.c.l.b16 %v170
    %v582 = vunpack.c.h.b16 %v170
    %v583 = vunpack.c.l.b16 %v171
    %v584 = vunpack.c.h.b16 %v171
    %v585 = vunpack.c.l.b16 %v172
    %v586 = vunpack.c.h.b16 %v172
    %v587 = vunpack.c.l.b16 %v173
    %v588 = vunpack.c.h.b16 %v173
    %v589 = vpack.c.b16 %v341, %v333
    %v590 = vpack.c.b16 %v342, %v334
    %v591 = vpack.c.b16 %v343, %v335
    %v592 = vpack.c.b16 %v344, %v336
    %v593 = vpack.c.b16 %v345, %v337
    %v594 = vpack.c.b16 %v346, %v338
    %v595 = vpack.c.b16 %v347, %v339
    %v596 = vpack.c.b16 %v348, %v340
    %v597 = vpack.c.b16 %v357, %v349
    %v598 = vpack.c.b16 %v358, %v350
    %v599 = vpack.c.b16 %v359, %v351
    %v600 = vpack.c.b16 %v360, %v352
    %v601 = vpack.c.b16 %v361, %v353
    %v602 = vpack.c.b16 %v362, %v354
    %v603 = vpack.c.b16 %v363, %v355
    %v604 = vpack.c.b16 %v364, %v356
    %v605 = vpack.c.b16 %v373, %v365
    %v606 = vpack.c.b16 %v374, %v366
    %v607 = vpack.c.b16 %v375, %v367
    %v608 = vpack.c.b16 %v376, %v368
    %v609 = vpack.c.b16 %v377, %v369
    %v610 = vpack.c.b16 %v378, %v370
    %v611 = vpack.c.b16 %v379, %v371
    %v612 = vpack.c.b16 %v380, %v372
    %v613 = vpack.c.b16 %v389, %v381
    %v614 = vpack.c.b16 %v390, %v382
    %v615 = vpack.c.b16 %v391, %v383
    %v616 = vpack.c.b16 %v392, %v384
    %v617 = vpack.c.b16 %v393, %v385
    %v618 = vpack.c.b16 %v394, %v386
    %v619 = vpack.c.b16 %v395, %v387
    %v620 = vpack.c.b16 %v396, %v388
    %v621 = vpack.c.b16 %v405, %v397
    %v622 = vpack.c.b16 %v406, %v398
    %v623 = vpack.c.b16 %v407, %v399
    %v624 = vpack.c.b16 %v408, %v400
    %v625 = vpack.c.b16 %v409, %v401
    %v626 = vpack.c.b16 %v410, %v402
    %v627 = vpack.c.b16 %v411, %v403
    %v628 = vpack.c.b16 %v412, %v404
    %v629 = vpack.c.b16 %v421, %v413
    %v630 = vpack.c.b16 %v422, %v414
    %v631 = vpack.c.b16 %v423, %v415
    %v632 = vpack.c.b16 %v424, %v416
    %v633 = vpack.c.b16 %v425, %v417
    %v634 = vpack.c.b16 %v426, %v418
    %v635 = vpack.c.b16 %v427, %v419
    %v636 = vpack.c.b16 %v428, %v420
    %v637 = vpack.c.b16 %v437, %v429
    %v638 = vpack.c.b16 %v438, %v430
    %v639 = vpack.c.b16 %v439, %v431
    %v640 = vpack.c.b16 %v440, %v432
    %v641 = vpack.c.b16 %v441, %v433
    %v642 = vpack.c.b16 %v442, %v434
    %v643 = vpack.c.b16 %v443, %v435
    %v644 = vpack.c.b16 %v444, %v436
    %v645 = vpack.c.b16 %v453, %v445
    %v646 = vpack.c.b16 %v454, %v446
    %v647 = vpack.c.b16 %v455, %v447
    %v648 = vpack.c.b16 %v456, %v448
    %v649 = vpack.c.b16 %v457, %v449
    %v650 = vpack.c.b16 %v458, %v450
    %v651 = vpack.c.b16 %v459, %v451
    %v652 = vpack.c.b16 %v460, %v452
    %v653 = vpack.c.b16 %v469, %v461
    %v654 = vpack.c.b16 %v470, %v462
    %v655 = vpack.c.b16 %v471, %v463
    %v656 = vpack.c.b16 %v472, %v464
    %v657 = vpack.c.b16 %v473, %v465
    %v658 = vpack.c.b16 %v474, %v466
    %v659 = vpack.c.b16 %v475, %v467
    %v660 = vpack.c.b16 %v476, %v468
    %v661 = vpack.c.b16 %v485, %v477
    %v662 = vpack.c.b16 %v486, %v478
    %v663 = vpack.c.b16 %v487, %v479
    %v664 = vpack.c.b16 %v488, %v480
    %v665 = vpack.c.b16 %v489, %v481
    %v666 = vpack.c.b16 %v490, %v482
    %v667 = vpack.c.b16 %v491, %v483
    %v668 = vpack.c.b16 %v492, %v484
    %v669 = vpack.c.b16 %v501, %v493
    %v670 = vpack.c.b16 %v502, %v494
    %v671 = vpack.c.b16 %v503, %v495
    %v672 = vpack.c.b16 %v504, %v496
    %v673 = vpack.c.b16 %v505, %v497
    %v674 = vpack.c.b16 %v506, %v498
    %v675 = vpack.c.b16 %v507, %v499
    %v676 = vpack.c.b16 %v508, %v500
    %v677 = vpack.c.b16 %v517, %v509
    %v678 = vpack.c.b16 %v518, %v510
    %v679 = vpack.c.b16 %v519, %v511
    %v680 = vpack.c.b16 %v520, %v512
    %v681 = vpack.c.b16 %v521, %v513
    %v682 = vpack.c.b16 %v522, %v514
    %v683 = vpack.c.b16 %v523, %v515
    %v684 = vpack.c.b16 %v524, %v516
    %v685 = vpack.c.b16 %v533, %v525
    %v686 = vpack.c.b16 %v534, %v526
    %v687 = vpack.c.b16 %v535, %v527
    %v688 = vpack.c.b16 %v536, %v528
    %v689 = vpack.c.b16 %v537, %v529
    %v690 = vpack.c.b16 %v538, %v530
    %v691 = vpack.c.b16 %v539, %v531
    %v692 = vpack.c.b16 %v540, %v532
    %v693 = vpack.c.b16 %v549, %v541
    %v694 = vpack.c.b16 %v550, %v542
    %v695 = vpack.c.b16 %v551, %v543
    %v696 = vpack.c.b16 %v552, %v544
    %v697 = vpack.c.b16 %v553, %v545
    %v698 = vpack.c.b16 %v554, %v546
    %v699 = vpack.c.b16 %v555, %v547
    %v700 = vpack.c.b16 %v556, %v548
    %v701 = vpack.c.b16 %v565, %v557
    %v702 = vpack.c.b16 %v566, %v558
    %v703 = vpack.c.b16 %v567, %v559
    %v704 = vpack.c.b16 %v568, %v560
    %v705 = vpack.c.b16 %v569, %v561
    %v706 = vpack.c.b16 %v570, %v562
    %v707 = vpack.c.b16 %v571, %v563
    %v708 = vpack.c.b16 %v572, %v564
    %v709 = vpack.c.b16 %v581, %v573
    %v710 = vpack.c.b16 %v582, %v574
    %v711 = vpack.c.b16 %v583, %v575
    %v712 = vpack.c.b16 %v584, %v576
    %v713 = vpack.c.b16 %v585, %v577
    %v714 = vpack.c.b16 %v586, %v578
    %v715 = vpack.c.b16 %v587, %v579
    %v716 = vpack.c.b16 %v588, %v580
    %845 = vmatpush.bf16.msra.mxu0 %v645
    %846 = vmatpush.bf16.msra.mxu0 %v637
    %847 = vmatpush.bf16.msra.mxu0 %v629
    %848 = vmatpush.bf16.msra.mxu0 %v621
    %849 = vmatpush.bf16.msra.mxu0 %v613
    %850 = vmatpush.bf16.msra.mxu0 %v605
    %851 = vmatpush.bf16.msra.mxu0 %v597
    %852 = vmatpush.bf16.msra.mxu0 %v589
    %853 = vmatmul.bf16.gmra.mxu0 %v44
    %v854 = vpop.f32.mrf.mxu0
    %v855 = vadd.f32 0.0, %v854
    %v856 = vpop.f32.mrf.mxu0
    %857 = vdwg.mxu0
    %858 = vmatpush.bf16.msra.mxu0 %v709
    %859 = vmatpush.bf16.msra.mxu0 %v701
    %860 = vmatpush.bf16.msra.mxu0 %v693
    %861 = vmatpush.bf16.msra.mxu0 %v685
    %862 = vmatpush.bf16.msra.mxu0 %v677
    %863 = vmatpush.bf16.msra.mxu0 %v669
    %864 = vmatpush.bf16.msra.mxu0 %v661
    %865 = vmatpush.bf16.msra.mxu0 %v653
    %866 = vmatmul.bf16.gmra.mxu0 %v45
    %v867 = vpop.f32.mrf.mxu0
    %v868 = vadd.f32 %v855, %v867
    %v869 = vpop.f32.mrf.mxu0
    %870 = vdwg.mxu0
    %871 = vmatpush.bf16.msra.mxu0 %v646
    %872 = vmatpush.bf16.msra.mxu0 %v638
    %873 = vmatpush.bf16.msra.mxu0 %v630
    %874 = vmatpush.bf16.msra.mxu0 %v622
    %875 = vmatpush.bf16.msra.mxu0 %v614
    %876 = vmatpush.bf16.msra.mxu0 %v606
    %877 = vmatpush.bf16.msra.mxu0 %v598
    %878 = vmatpush.bf16.msra.mxu0 %v590
    %879 = vmatmul.bf16.gmra.mxu0 %v44
    %v880 = vpop.f32.mrf.mxu0
    %v881 = vadd.f32 0.0, %v880
    %v882 = vpop.f32.mrf.mxu0
    %883 = vdwg.mxu0
    %884 = vmatpush.bf16.msra.mxu0 %v710
    %885 = vmatpush.bf16.msra.mxu0 %v702
    %886 = vmatpush.bf16.msra.mxu0 %v694
    %887 = vmatpush.bf16.msra.mxu0 %v686
    %888 = vmatpush.bf16.msra.mxu0 %v678
    %889 = vmatpush.bf16.msra.mxu0 %v670
    %890 = vmatpush.bf16.msra.mxu0 %v662
    %891 = vmatpush.bf16.msra.mxu0 %v654
    %892 = vmatmul.bf16.gmra.mxu0 %v45
    %v893 = vpop.f32.mrf.mxu0
    %v894 = vadd.f32 %v881, %v893
    %v895 = vpop.f32.mrf.mxu0
    %896 = vdwg.mxu0
    %897 = vmatpush.bf16.msra.mxu0 %v647
    %898 = vmatpush.bf16.msra.mxu0 %v639
    %899 = vmatpush.bf16.msra.mxu0 %v631
    %900 = vmatpush.bf16.msra.mxu0 %v623
    %901 = vmatpush.bf16.msra.mxu0 %v615
    %902 = vmatpush.bf16.msra.mxu0 %v607
    %903 = vmatpush.bf16.msra.mxu0 %v599
    %904 = vmatpush.bf16.msra.mxu0 %v591
    %905 = vmatmul.bf16.gmra.mxu0 %v44
    %v906 = vpop.f32.mrf.mxu0
    %v907 = vadd.f32 0.0, %v906
    %v908 = vpop.f32.mrf.mxu0
    %909 = vdwg.mxu0
    %910 = vmatpush.bf16.msra.mxu0 %v711
    %911 = vmatpush.bf16.msra.mxu0 %v703
    %912 = vmatpush.bf16.msra.mxu0 %v695
    %913 = vmatpush.bf16.msra.mxu0 %v687
    %914 = vmatpush.bf16.msra.mxu0 %v679
    %915 = vmatpush.bf16.msra.mxu0 %v671
    %916 = vmatpush.bf16.msra.mxu0 %v663
    %917 = vmatpush.bf16.msra.mxu0 %v655
    %918 = vmatmul.bf16.gmra.mxu0 %v45
    %v919 = vpop.f32.mrf.mxu0
    %v920 = vadd.f32 %v907, %v919
    %v921 = vpop.f32.mrf.mxu0
    %922 = vdwg.mxu0
    %923 = vmatpush.bf16.msra.mxu0 %v648
    %924 = vmatpush.bf16.msra.mxu0 %v640
    %925 = vmatpush.bf16.msra.mxu0 %v632
    %926 = vmatpush.bf16.msra.mxu0 %v624
    %927 = vmatpush.bf16.msra.mxu0 %v616
    %928 = vmatpush.bf16.msra.mxu0 %v608
    %929 = vmatpush.bf16.msra.mxu0 %v600
    %930 = vmatpush.bf16.msra.mxu0 %v592
    %931 = vmatmul.bf16.gmra.mxu0 %v44
    %v932 = vpop.f32.mrf.mxu0
    %v933 = vadd.f32 0.0, %v932
    %v934 = vpop.f32.mrf.mxu0
    %935 = vdwg.mxu0
    %936 = vmatpush.bf16.msra.mxu0 %v712
    %937 = vmatpush.bf16.msra.mxu0 %v704
    %938 = vmatpush.bf16.msra.mxu0 %v696
    %939 = vmatpush.bf16.msra.mxu0 %v688
    %940 = vmatpush.bf16.msra.mxu0 %v680
    %941 = vmatpush.bf16.msra.mxu0 %v672
    %942 = vmatpush.bf16.msra.mxu0 %v664
    %943 = vmatpush.bf16.msra.mxu0 %v656
    %944 = vmatmul.bf16.gmra.mxu0 %v45
    %v945 = vpop.f32.mrf.mxu0
    %v946 = vadd.f32 %v933, %v945
    %v947 = vpop.f32.mrf.mxu0
    %948 = vdwg.mxu0
    %949 = vmatpush.bf16.msra.mxu0 %v649
    %950 = vmatpush.bf16.msra.mxu0 %v641
    %951 = vmatpush.bf16.msra.mxu0 %v633
    %952 = vmatpush.bf16.msra.mxu0 %v625
    %953 = vmatpush.bf16.msra.mxu0 %v617
    %954 = vmatpush.bf16.msra.mxu0 %v609
    %955 = vmatpush.bf16.msra.mxu0 %v601
    %956 = vmatpush.bf16.msra.mxu0 %v593
    %957 = vmatmul.bf16.gmra.mxu0 %v44
    %v958 = vpop.f32.mrf.mxu0
    %v959 = vadd.f32 0.0, %v958
    %v960 = vpop.f32.mrf.mxu0
    %961 = vdwg.mxu0
    %962 = vmatpush.bf16.msra.mxu0 %v713
    %963 = vmatpush.bf16.msra.mxu0 %v705
    %964 = vmatpush.bf16.msra.mxu0 %v697
    %965 = vmatpush.bf16.msra.mxu0 %v689
    %966 = vmatpush.bf16.msra.mxu0 %v681
    %967 = vmatpush.bf16.msra.mxu0 %v673
    %968 = vmatpush.bf16.msra.mxu0 %v665
    %969 = vmatpush.bf16.msra.mxu0 %v657
    %970 = vmatmul.bf16.gmra.mxu0 %v45
    %v971 = vpop.f32.mrf.mxu0
    %v972 = vadd.f32 %v959, %v971
    %v973 = vpop.f32.mrf.mxu0
    %974 = vdwg.mxu0
    %975 = vmatpush.bf16.msra.mxu0 %v650
    %976 = vmatpush.bf16.msra.mxu0 %v642
    %977 = vmatpush.bf16.msra.mxu0 %v634
    %978 = vmatpush.bf16.msra.mxu0 %v626
    %979 = vmatpush.bf16.msra.mxu0 %v618
    %980 = vmatpush.bf16.msra.mxu0 %v610
    %981 = vmatpush.bf16.msra.mxu0 %v602
    %982 = vmatpush.bf16.msra.mxu0 %v594
    %983 = vmatmul.bf16.gmra.mxu0 %v44
    %v984 = vpop.f32.mrf.mxu0
    %v985 = vadd.f32 0.0, %v984
    %v986 = vpop.f32.mrf.mxu0
    %987 = vdwg.mxu0
    %988 = vmatpush.bf16.msra.mxu0 %v714
    %989 = vmatpush.bf16.msra.mxu0 %v706
    %990 = vmatpush.bf16.msra.mxu0 %v698
    %991 = vmatpush.bf16.msra.mxu0 %v690
    %992 = vmatpush.bf16.msra.mxu0 %v682
    %993 = vmatpush.bf16.msra.mxu0 %v674
    %994 = vmatpush.bf16.msra.mxu0 %v666
    %995 = vmatpush.bf16.msra.mxu0 %v658
    %996 = vmatmul.bf16.gmra.mxu0 %v45
    %v997 = vpop.f32.mrf.mxu0
    %v998 = vadd.f32 %v985, %v997
    %v999 = vpop.f32.mrf.mxu0
    %1000 = vdwg.mxu0
    %1001 = vmatpush.bf16.msra.mxu0 %v651
    %1002 = vmatpush.bf16.msra.mxu0 %v643
    %1003 = vmatpush.bf16.msra.mxu0 %v635
    %1004 = vmatpush.bf16.msra.mxu0 %v627
    %1005 = vmatpush.bf16.msra.mxu0 %v619
    %1006 = vmatpush.bf16.msra.mxu0 %v611
    %1007 = vmatpush.bf16.msra.mxu0 %v603
    %1008 = vmatpush.bf16.msra.mxu0 %v595
    %1009 = vmatmul.bf16.gmra.mxu0 %v44
    %v1010 = vpop.f32.mrf.mxu0
    %v1011 = vadd.f32 0.0, %v1010
    %v1012 = vpop.f32.mrf.mxu0
    %1013 = vdwg.mxu0
    %1014 = vmatpush.bf16.msra.mxu0 %v715
    %1015 = vmatpush.bf16.msra.mxu0 %v707
    %1016 = vmatpush.bf16.msra.mxu0 %v699
    %1017 = vmatpush.bf16.msra.mxu0 %v691
    %1018 = vmatpush.bf16.msra.mxu0 %v683
    %1019 = vmatpush.bf16.msra.mxu0 %v675
    %1020 = vmatpush.bf16.msra.mxu0 %v667
    %1021 = vmatpush.bf16.msra.mxu0 %v659
    %1022 = vmatmul.bf16.gmra.mxu0 %v45
    %v1023 = vpop.f32.mrf.mxu0
    %v1024 = vadd.f32 %v1011, %v1023
    %v1025 = vpop.f32.mrf.mxu0
    %1026 = vdwg.mxu0
    %1027 = vmatpush.bf16.msra.mxu0 %v652
    %1028 = vmatpush.bf16.msra.mxu0 %v644
    %1029 = vmatpush.bf16.msra.mxu0 %v636
    %1030 = vmatpush.bf16.msra.mxu0 %v628
    %1031 = vmatpush.bf16.msra.mxu0 %v620
    %1032 = vmatpush.bf16.msra.mxu0 %v612
    %1033 = vmatpush.bf16.msra.mxu0 %v604
    %1034 = vmatpush.bf16.msra.mxu0 %v596
    %1035 = vmatmul.bf16.gmra.mxu0 %v44
    %v1036 = vpop.f32.mrf.mxu0
    %v1037 = vadd.f32 0.0, %v1036
    %v1038 = vpop.f32.mrf.mxu0
    %1039 = vdwg.mxu0
    %1040 = vmatpush.bf16.msra.mxu0 %v716
    %1041 = vmatpush.bf16.msra.mxu0 %v708
    %1042 = vmatpush.bf16.msra.mxu0 %v700
    %1043 = vmatpush.bf16.msra.mxu0 %v692
    %1044 = vmatpush.bf16.msra.mxu0 %v684
    %1045 = vmatpush.bf16.msra.mxu0 %v676
    %1046 = vmatpush.bf16.msra.mxu0 %v668
    %1047 = vmatpush.bf16.msra.mxu0 %v660
    %1048 = vmatmul.bf16.gmra.mxu0 %v45
    %v1049 = vpop.f32.mrf.mxu0
    %v1050 = vadd.f32 %v1037, %v1049
    %v1051 = vpop.f32.mrf.mxu0
    %1052 = vdwg.mxu0
    %v1053 = vpack.c.bf16 %v894, %v868
    %v1054 = vpack.c.bf16 %v946, %v920
    %v1055 = vpack.c.bf16 %v998, %v972
    %v1056 = vpack.c.bf16 %v1050, %v1024
    %v1061 = vrot.slane %v1053, 3
    %v1062 = vrot.slane %v1054, 6
    %v1063 = vrot.slane %v1054, 1
    %v1064 = vrot.slane %v1055, 4
    %v1065 = vrot.slane %v1055, 7
    %v1066 = vrot.slane %v1056, 2
    %v1067 = vrot.slane %v1056, 5
    %vm1068 = vcmask 1040384
    %v1071 = vsel %vm1068, %v1053, %v1061
    %vm1072 = vcmask 1042434
    %v1075 = vsel %vm1072, %v1062, %v1063
    %vm1076 = vcmask 1041408
    %v1077 = vsel %vm1076, %v1071, %v1075
    %vm1078 = vcmask 1044484
    %v1081 = vsel %vm1078, %v1064, %v1065
    %vm1082 = vcmask 1046534
    %v1085 = vsel %vm1082, %v1066, %v1067
    %vm1086 = vcmask 1045508
    %v1087 = vsel %vm1086, %v1081, %v1085
    %vm1088 = vcmask 1043456
    %v1089 = vsel %vm1088, %v1077, %v1087
    %1091 = vst [vmem:[%s4] sm:$0xff] %v1089
    %1092 = vmatpush.bf16.xpose.msra.mxu0 0
    %1093 = vmatpush.bf16.xpose.msra.mxu0 0
    %1094 = vmatpush.bf16.xpose.msra.mxu0 0
    %1095 = vmatpush.bf16.xpose.msra.mxu0 0
    %1096 = vmatpush.bf16.xpose.msra.mxu0 0
    %1097 = vmatpush.bf16.xpose.msra.mxu0 0
    %1098 = vmatpush.bf16.xpose.msra.mxu0 0
    %1099 = vmatpush.bf16.xpose.msra.mxu0 %v197
    %1100 = vmatmul.bf16.gmra.mxu0 %v589
    %v1101 = vpop.f32.mrf.mxu0
    %v1102 = vadd.f32 0.0, %v1101
    %v1103 = vpop.f32.mrf.mxu0
    %v1104 = vadd.f32 0.0, %v1103
    %1105 = vmatmul.bf16.gmra.mxu0 %v597
    %v1106 = vpop.f32.mrf.mxu0
    %v1107 = vadd.f32 0.0, %v1106
    %v1108 = vpop.f32.mrf.mxu0
    %v1109 = vadd.f32 0.0, %v1108
    %1110 = vmatmul.bf16.gmra.mxu0 %v605
    %v1111 = vpop.f32.mrf.mxu0
    %v1112 = vadd.f32 0.0, %v1111
    %v1113 = vpop.f32.mrf.mxu0
    %v1114 = vadd.f32 0.0, %v1113
    %1115 = vmatmul.bf16.gmra.mxu0 %v613
    %v1116 = vpop.f32.mrf.mxu0
    %v1117 = vadd.f32 0.0, %v1116
    %v1118 = vpop.f32.mrf.mxu0
    %v1119 = vadd.f32 0.0, %v1118
    %1120 = vmatmul.bf16.gmra.mxu0 %v621
    %v1121 = vpop.f32.mrf.mxu0
    %v1122 = vadd.f32 0.0, %v1121
    %v1123 = vpop.f32.mrf.mxu0
    %v1124 = vadd.f32 0.0, %v1123
    %1125 = vmatmul.bf16.gmra.mxu0 %v629
    %v1126 = vpop.f32.mrf.mxu0
    %v1127 = vadd.f32 0.0, %v1126
    %v1128 = vpop.f32.mrf.mxu0
    %v1129 = vadd.f32 0.0, %v1128
    %1130 = vmatmul.bf16.gmra.mxu0 %v637
    %v1131 = vpop.f32.mrf.mxu0
    %v1132 = vadd.f32 0.0, %v1131
    %v1133 = vpop.f32.mrf.mxu0
    %v1134 = vadd.f32 0.0, %v1133
    %1135 = vmatmul.bf16.gmra.mxu0 %v645
    %v1136 = vpop.f32.mrf.mxu0
    %v1137 = vadd.f32 0.0, %v1136
    %v1138 = vpop.f32.mrf.mxu0
    %v1139 = vadd.f32 0.0, %v1138
    %1140 = vmatmul.bf16.gmra.mxu0 %v653
    %v1141 = vpop.f32.mrf.mxu0
    %v1142 = vadd.f32 0.0, %v1141
    %v1143 = vpop.f32.mrf.mxu0
    %v1144 = vadd.f32 0.0, %v1143
    %1145 = vmatmul.bf16.gmra.mxu0 %v661
    %v1146 = vpop.f32.mrf.mxu0
    %v1147 = vadd.f32 0.0, %v1146
    %v1148 = vpop.f32.mrf.mxu0
    %v1149 = vadd.f32 0.0, %v1148
    %1150 = vmatmul.bf16.gmra.mxu0 %v669
    %v1151 = vpop.f32.mrf.mxu0
    %v1152 = vadd.f32 0.0, %v1151
    %v1153 = vpop.f32.mrf.mxu0
    %v1154 = vadd.f32 0.0, %v1153
    %1155 = vmatmul.bf16.gmra.mxu0 %v677
    %v1156 = vpop.f32.mrf.mxu0
    %v1157 = vadd.f32 0.0, %v1156
    %v1158 = vpop.f32.mrf.mxu0
    %v1159 = vadd.f32 0.0, %v1158
    %1160 = vmatmul.bf16.gmra.mxu0 %v685
    %v1161 = vpop.f32.mrf.mxu0
    %v1162 = vadd.f32 0.0, %v1161
    %v1163 = vpop.f32.mrf.mxu0
    %v1164 = vadd.f32 0.0, %v1163
    %1165 = vmatmul.bf16.gmra.mxu0 %v693
    %v1166 = vpop.f32.mrf.mxu0
    %v1167 = vadd.f32 0.0, %v1166
    %v1168 = vpop.f32.mrf.mxu0
    %v1169 = vadd.f32 0.0, %v1168
    %1170 = vmatmul.bf16.gmra.mxu0 %v701
    %v1171 = vpop.f32.mrf.mxu0
    %v1172 = vadd.f32 0.0, %v1171
    %v1173 = vpop.f32.mrf.mxu0
    %v1174 = vadd.f32 0.0, %v1173
    %1175 = vmatmul.bf16.gmra.mxu0 %v709
    %v1176 = vpop.f32.mrf.mxu0
    %v1177 = vadd.f32 0.0, %v1176
    %v1178 = vpop.f32.mrf.mxu0
    %v1179 = vadd.f32 0.0, %v1178
    %1180 = vdwg.mxu0
    %1181 = vmatpush.bf16.xpose.msra.mxu0 0
    %1182 = vmatpush.bf16.xpose.msra.mxu0 0
    %1183 = vmatpush.bf16.xpose.msra.mxu0 0
    %1184 = vmatpush.bf16.xpose.msra.mxu0 0
    %1185 = vmatpush.bf16.xpose.msra.mxu0 0
    %1186 = vmatpush.bf16.xpose.msra.mxu0 0
    %1187 = vmatpush.bf16.xpose.msra.mxu0 0
    %1188 = vmatpush.bf16.xpose.msra.mxu0 %v198
    %1189 = vmatmul.bf16.gmra.mxu0 %v590
    %v1190 = vpop.f32.mrf.mxu0
    %v1191 = vadd.f32 %v1102, %v1190
    %v1192 = vpop.f32.mrf.mxu0
    %v1193 = vadd.f32 %v1104, %v1192
    %1194 = vmatmul.bf16.gmra.mxu0 %v598
    %v1195 = vpop.f32.mrf.mxu0
    %v1196 = vadd.f32 %v1107, %v1195
    %v1197 = vpop.f32.mrf.mxu0
    %v1198 = vadd.f32 %v1109, %v1197
    %1199 = vmatmul.bf16.gmra.mxu0 %v606
    %v1200 = vpop.f32.mrf.mxu0
    %v1201 = vadd.f32 %v1112, %v1200
    %v1202 = vpop.f32.mrf.mxu0
    %v1203 = vadd.f32 %v1114, %v1202
    %1204 = vmatmul.bf16.gmra.mxu0 %v614
    %v1205 = vpop.f32.mrf.mxu0
    %v1206 = vadd.f32 %v1117, %v1205
    %v1207 = vpop.f32.mrf.mxu0
    %v1208 = vadd.f32 %v1119, %v1207
    %1209 = vmatmul.bf16.gmra.mxu0 %v622
    %v1210 = vpop.f32.mrf.mxu0
    %v1211 = vadd.f32 %v1122, %v1210
    %v1212 = vpop.f32.mrf.mxu0
    %v1213 = vadd.f32 %v1124, %v1212
    %1214 = vmatmul.bf16.gmra.mxu0 %v630
    %v1215 = vpop.f32.mrf.mxu0
    %v1216 = vadd.f32 %v1127, %v1215
    %v1217 = vpop.f32.mrf.mxu0
    %v1218 = vadd.f32 %v1129, %v1217
    %1219 = vmatmul.bf16.gmra.mxu0 %v638
    %v1220 = vpop.f32.mrf.mxu0
    %v1221 = vadd.f32 %v1132, %v1220
    %v1222 = vpop.f32.mrf.mxu0
    %v1223 = vadd.f32 %v1134, %v1222
    %1224 = vmatmul.bf16.gmra.mxu0 %v646
    %v1225 = vpop.f32.mrf.mxu0
    %v1226 = vadd.f32 %v1137, %v1225
    %v1227 = vpop.f32.mrf.mxu0
    %v1228 = vadd.f32 %v1139, %v1227
    %1229 = vmatmul.bf16.gmra.mxu0 %v654
    %v1230 = vpop.f32.mrf.mxu0
    %v1231 = vadd.f32 %v1142, %v1230
    %v1232 = vpop.f32.mrf.mxu0
    %v1233 = vadd.f32 %v1144, %v1232
    %1234 = vmatmul.bf16.gmra.mxu0 %v662
    %v1235 = vpop.f32.mrf.mxu0
    %v1236 = vadd.f32 %v1147, %v1235
    %v1237 = vpop.f32.mrf.mxu0
    %v1238 = vadd.f32 %v1149, %v1237
    %1239 = vmatmul.bf16.gmra.mxu0 %v670
    %v1240 = vpop.f32.mrf.mxu0
    %v1241 = vadd.f32 %v1152, %v1240
    %v1242 = vpop.f32.mrf.mxu0
    %v1243 = vadd.f32 %v1154, %v1242
    %1244 = vmatmul.bf16.gmra.mxu0 %v678
    %v1245 = vpop.f32.mrf.mxu0
    %v1246 = vadd.f32 %v1157, %v1245
    %v1247 = vpop.f32.mrf.mxu0
    %v1248 = vadd.f32 %v1159, %v1247
    %1249 = vmatmul.bf16.gmra.mxu0 %v686
    %v1250 = vpop.f32.mrf.mxu0
    %v1251 = vadd.f32 %v1162, %v1250
    %v1252 = vpop.f32.mrf.mxu0
    %v1253 = vadd.f32 %v1164, %v1252
    %1254 = vmatmul.bf16.gmra.mxu0 %v694
    %v1255 = vpop.f32.mrf.mxu0
    %v1256 = vadd.f32 %v1167, %v1255
    %v1257 = vpop.f32.mrf.mxu0
    %v1258 = vadd.f32 %v1169, %v1257
    %1259 = vmatmul.bf16.gmra.mxu0 %v702
    %v1260 = vpop.f32.mrf.mxu0
    %v1261 = vadd.f32 %v1172, %v1260
    %v1262 = vpop.f32.mrf.mxu0
    %v1263 = vadd.f32 %v1174, %v1262
    %1264 = vmatmul.bf16.gmra.mxu0 %v710
    %v1265 = vpop.f32.mrf.mxu0
    %v1266 = vadd.f32 %v1177, %v1265
    %v1267 = vpop.f32.mrf.mxu0
    %v1268 = vadd.f32 %v1179, %v1267
    %1269 = vdwg.mxu0
    %1270 = vmatpush.bf16.xpose.msra.mxu0 0
    %1271 = vmatpush.bf16.xpose.msra.mxu0 0
    %1272 = vmatpush.bf16.xpose.msra.mxu0 0
    %1273 = vmatpush.bf16.xpose.msra.mxu0 0
    %1274 = vmatpush.bf16.xpose.msra.mxu0 0
    %1275 = vmatpush.bf16.xpose.msra.mxu0 0
    %1276 = vmatpush.bf16.xpose.msra.mxu0 0
    %1277 = vmatpush.bf16.xpose.msra.mxu0 %v199
    %1278 = vmatmul.bf16.gmra.mxu0 %v591
    %v1279 = vpop.f32.mrf.mxu0
    %v1280 = vadd.f32 %v1191, %v1279
    %v1281 = vpop.f32.mrf.mxu0
    %v1282 = vadd.f32 %v1193, %v1281
    %1283 = vmatmul.bf16.gmra.mxu0 %v599
    %v1284 = vpop.f32.mrf.mxu0
    %v1285 = vadd.f32 %v1196, %v1284
    %v1286 = vpop.f32.mrf.mxu0
    %v1287 = vadd.f32 %v1198, %v1286
    %1288 = vmatmul.bf16.gmra.mxu0 %v607
    %v1289 = vpop.f32.mrf.mxu0
    %v1290 = vadd.f32 %v1201, %v1289
    %v1291 = vpop.f32.mrf.mxu0
    %v1292 = vadd.f32 %v1203, %v1291
    %1293 = vmatmul.bf16.gmra.mxu0 %v615
    %v1294 = vpop.f32.mrf.mxu0
    %v1295 = vadd.f32 %v1206, %v1294
    %v1296 = vpop.f32.mrf.mxu0
    %v1297 = vadd.f32 %v1208, %v1296
    %1298 = vmatmul.bf16.gmra.mxu0 %v623
    %v1299 = vpop.f32.mrf.mxu0
    %v1300 = vadd.f32 %v1211, %v1299
    %v1301 = vpop.f32.mrf.mxu0
    %v1302 = vadd.f32 %v1213, %v1301
    %1303 = vmatmul.bf16.gmra.mxu0 %v631
    %v1304 = vpop.f32.mrf.mxu0
    %v1305 = vadd.f32 %v1216, %v1304
    %v1306 = vpop.f32.mrf.mxu0
    %v1307 = vadd.f32 %v1218, %v1306
    %1308 = vmatmul.bf16.gmra.mxu0 %v639
    %v1309 = vpop.f32.mrf.mxu0
    %v1310 = vadd.f32 %v1221, %v1309
    %v1311 = vpop.f32.mrf.mxu0
    %v1312 = vadd.f32 %v1223, %v1311
    %1313 = vmatmul.bf16.gmra.mxu0 %v647
    %v1314 = vpop.f32.mrf.mxu0
    %v1315 = vadd.f32 %v1226, %v1314
    %v1316 = vpop.f32.mrf.mxu0
    %v1317 = vadd.f32 %v1228, %v1316
    %1318 = vmatmul.bf16.gmra.mxu0 %v655
    %v1319 = vpop.f32.mrf.mxu0
    %v1320 = vadd.f32 %v1231, %v1319
    %v1321 = vpop.f32.mrf.mxu0
    %v1322 = vadd.f32 %v1233, %v1321
    %1323 = vmatmul.bf16.gmra.mxu0 %v663
    %v1324 = vpop.f32.mrf.mxu0
    %v1325 = vadd.f32 %v1236, %v1324
    %v1326 = vpop.f32.mrf.mxu0
    %v1327 = vadd.f32 %v1238, %v1326
    %1328 = vmatmul.bf16.gmra.mxu0 %v671
    %v1329 = vpop.f32.mrf.mxu0
    %v1330 = vadd.f32 %v1241, %v1329
    %v1331 = vpop.f32.mrf.mxu0
    %v1332 = vadd.f32 %v1243, %v1331
    %1333 = vmatmul.bf16.gmra.mxu0 %v679
    %v1334 = vpop.f32.mrf.mxu0
    %v1335 = vadd.f32 %v1246, %v1334
    %v1336 = vpop.f32.mrf.mxu0
    %v1337 = vadd.f32 %v1248, %v1336
    %1338 = vmatmul.bf16.gmra.mxu0 %v687
    %v1339 = vpop.f32.mrf.mxu0
    %v1340 = vadd.f32 %v1251, %v1339
    %v1341 = vpop.f32.mrf.mxu0
    %v1342 = vadd.f32 %v1253, %v1341
    %1343 = vmatmul.bf16.gmra.mxu0 %v695
    %v1344 = vpop.f32.mrf.mxu0
    %v1345 = vadd.f32 %v1256, %v1344
    %v1346 = vpop.f32.mrf.mxu0
    %v1347 = vadd.f32 %v1258, %v1346
    %1348 = vmatmul.bf16.gmra.mxu0 %v703
    %v1349 = vpop.f32.mrf.mxu0
    %v1350 = vadd.f32 %v1261, %v1349
    %v1351 = vpop.f32.mrf.mxu0
    %v1352 = vadd.f32 %v1263, %v1351
    %1353 = vmatmul.bf16.gmra.mxu0 %v711
    %v1354 = vpop.f32.mrf.mxu0
    %v1355 = vadd.f32 %v1266, %v1354
    %v1356 = vpop.f32.mrf.mxu0
    %v1357 = vadd.f32 %v1268, %v1356
    %1358 = vdwg.mxu0
    %1359 = vmatpush.bf16.xpose.msra.mxu0 0
    %1360 = vmatpush.bf16.xpose.msra.mxu0 0
    %1361 = vmatpush.bf16.xpose.msra.mxu0 0
    %1362 = vmatpush.bf16.xpose.msra.mxu0 0
    %1363 = vmatpush.bf16.xpose.msra.mxu0 0
    %1364 = vmatpush.bf16.xpose.msra.mxu0 0
    %1365 = vmatpush.bf16.xpose.msra.mxu0 0
    %1366 = vmatpush.bf16.xpose.msra.mxu0 %v200
    %1367 = vmatmul.bf16.gmra.mxu0 %v592
    %v1368 = vpop.f32.mrf.mxu0
    %v1369 = vadd.f32 %v1280, %v1368
    %v1370 = vpop.f32.mrf.mxu0
    %v1371 = vadd.f32 %v1282, %v1370
    %1372 = vmatmul.bf16.gmra.mxu0 %v600
    %v1373 = vpop.f32.mrf.mxu0
    %v1374 = vadd.f32 %v1285, %v1373
    %v1375 = vpop.f32.mrf.mxu0
    %v1376 = vadd.f32 %v1287, %v1375
    %1377 = vmatmul.bf16.gmra.mxu0 %v608
    %v1378 = vpop.f32.mrf.mxu0
    %v1379 = vadd.f32 %v1290, %v1378
    %v1380 = vpop.f32.mrf.mxu0
    %v1381 = vadd.f32 %v1292, %v1380
    %1382 = vmatmul.bf16.gmra.mxu0 %v616
    %v1383 = vpop.f32.mrf.mxu0
    %v1384 = vadd.f32 %v1295, %v1383
    %v1385 = vpop.f32.mrf.mxu0
    %v1386 = vadd.f32 %v1297, %v1385
    %1387 = vmatmul.bf16.gmra.mxu0 %v624
    %v1388 = vpop.f32.mrf.mxu0
    %v1389 = vadd.f32 %v1300, %v1388
    %v1390 = vpop.f32.mrf.mxu0
    %v1391 = vadd.f32 %v1302, %v1390
    %1392 = vmatmul.bf16.gmra.mxu0 %v632
    %v1393 = vpop.f32.mrf.mxu0
    %v1394 = vadd.f32 %v1305, %v1393
    %v1395 = vpop.f32.mrf.mxu0
    %v1396 = vadd.f32 %v1307, %v1395
    %1397 = vmatmul.bf16.gmra.mxu0 %v640
    %v1398 = vpop.f32.mrf.mxu0
    %v1399 = vadd.f32 %v1310, %v1398
    %v1400 = vpop.f32.mrf.mxu0
    %v1401 = vadd.f32 %v1312, %v1400
    %1402 = vmatmul.bf16.gmra.mxu0 %v648
    %v1403 = vpop.f32.mrf.mxu0
    %v1404 = vadd.f32 %v1315, %v1403
    %v1405 = vpop.f32.mrf.mxu0
    %v1406 = vadd.f32 %v1317, %v1405
    %1407 = vmatmul.bf16.gmra.mxu0 %v656
    %v1408 = vpop.f32.mrf.mxu0
    %v1409 = vadd.f32 %v1320, %v1408
    %v1410 = vpop.f32.mrf.mxu0
    %v1411 = vadd.f32 %v1322, %v1410
    %1412 = vmatmul.bf16.gmra.mxu0 %v664
    %v1413 = vpop.f32.mrf.mxu0
    %v1414 = vadd.f32 %v1325, %v1413
    %v1415 = vpop.f32.mrf.mxu0
    %v1416 = vadd.f32 %v1327, %v1415
    %1417 = vmatmul.bf16.gmra.mxu0 %v672
    %v1418 = vpop.f32.mrf.mxu0
    %v1419 = vadd.f32 %v1330, %v1418
    %v1420 = vpop.f32.mrf.mxu0
    %v1421 = vadd.f32 %v1332, %v1420
    %1422 = vmatmul.bf16.gmra.mxu0 %v680
    %v1423 = vpop.f32.mrf.mxu0
    %v1424 = vadd.f32 %v1335, %v1423
    %v1425 = vpop.f32.mrf.mxu0
    %v1426 = vadd.f32 %v1337, %v1425
    %1427 = vmatmul.bf16.gmra.mxu0 %v688
    %v1428 = vpop.f32.mrf.mxu0
    %v1429 = vadd.f32 %v1340, %v1428
    %v1430 = vpop.f32.mrf.mxu0
    %v1431 = vadd.f32 %v1342, %v1430
    %1432 = vmatmul.bf16.gmra.mxu0 %v696
    %v1433 = vpop.f32.mrf.mxu0
    %v1434 = vadd.f32 %v1345, %v1433
    %v1435 = vpop.f32.mrf.mxu0
    %v1436 = vadd.f32 %v1347, %v1435
    %1437 = vmatmul.bf16.gmra.mxu0 %v704
    %v1438 = vpop.f32.mrf.mxu0
    %v1439 = vadd.f32 %v1350, %v1438
    %v1440 = vpop.f32.mrf.mxu0
    %v1441 = vadd.f32 %v1352, %v1440
    %1442 = vmatmul.bf16.gmra.mxu0 %v712
    %v1443 = vpop.f32.mrf.mxu0
    %v1444 = vadd.f32 %v1355, %v1443
    %v1445 = vpop.f32.mrf.mxu0
    %v1446 = vadd.f32 %v1357, %v1445
    %1447 = vdwg.mxu0
    %1448 = vmatpush.bf16.xpose.msra.mxu0 0
    %1449 = vmatpush.bf16.xpose.msra.mxu0 0
    %1450 = vmatpush.bf16.xpose.msra.mxu0 0
    %1451 = vmatpush.bf16.xpose.msra.mxu0 0
    %1452 = vmatpush.bf16.xpose.msra.mxu0 0
    %1453 = vmatpush.bf16.xpose.msra.mxu0 0
    %1454 = vmatpush.bf16.xpose.msra.mxu0 0
    %1455 = vmatpush.bf16.xpose.msra.mxu0 %v201
    %1456 = vmatmul.bf16.gmra.mxu0 %v593
    %v1457 = vpop.f32.mrf.mxu0
    %v1458 = vadd.f32 %v1369, %v1457
    %v1459 = vpop.f32.mrf.mxu0
    %v1460 = vadd.f32 %v1371, %v1459
    %1461 = vmatmul.bf16.gmra.mxu0 %v601
    %v1462 = vpop.f32.mrf.mxu0
    %v1463 = vadd.f32 %v1374, %v1462
    %v1464 = vpop.f32.mrf.mxu0
    %v1465 = vadd.f32 %v1376, %v1464
    %1466 = vmatmul.bf16.gmra.mxu0 %v609
    %v1467 = vpop.f32.mrf.mxu0
    %v1468 = vadd.f32 %v1379, %v1467
    %v1469 = vpop.f32.mrf.mxu0
    %v1470 = vadd.f32 %v1381, %v1469
    %1471 = vmatmul.bf16.gmra.mxu0 %v617
    %v1472 = vpop.f32.mrf.mxu0
    %v1473 = vadd.f32 %v1384, %v1472
    %v1474 = vpop.f32.mrf.mxu0
    %v1475 = vadd.f32 %v1386, %v1474
    %1476 = vmatmul.bf16.gmra.mxu0 %v625
    %v1477 = vpop.f32.mrf.mxu0
    %v1478 = vadd.f32 %v1389, %v1477
    %v1479 = vpop.f32.mrf.mxu0
    %v1480 = vadd.f32 %v1391, %v1479
    %1481 = vmatmul.bf16.gmra.mxu0 %v633
    %v1482 = vpop.f32.mrf.mxu0
    %v1483 = vadd.f32 %v1394, %v1482
    %v1484 = vpop.f32.mrf.mxu0
    %v1485 = vadd.f32 %v1396, %v1484
    %1486 = vmatmul.bf16.gmra.mxu0 %v641
    %v1487 = vpop.f32.mrf.mxu0
    %v1488 = vadd.f32 %v1399, %v1487
    %v1489 = vpop.f32.mrf.mxu0
    %v1490 = vadd.f32 %v1401, %v1489
    %1491 = vmatmul.bf16.gmra.mxu0 %v649
    %v1492 = vpop.f32.mrf.mxu0
    %v1493 = vadd.f32 %v1404, %v1492
    %v1494 = vpop.f32.mrf.mxu0
    %v1495 = vadd.f32 %v1406, %v1494
    %1496 = vmatmul.bf16.gmra.mxu0 %v657
    %v1497 = vpop.f32.mrf.mxu0
    %v1498 = vadd.f32 %v1409, %v1497
    %v1499 = vpop.f32.mrf.mxu0
    %v1500 = vadd.f32 %v1411, %v1499
    %1501 = vmatmul.bf16.gmra.mxu0 %v665
    %v1502 = vpop.f32.mrf.mxu0
    %v1503 = vadd.f32 %v1414, %v1502
    %v1504 = vpop.f32.mrf.mxu0
    %v1505 = vadd.f32 %v1416, %v1504
    %1506 = vmatmul.bf16.gmra.mxu0 %v673
    %v1507 = vpop.f32.mrf.mxu0
    %v1508 = vadd.f32 %v1419, %v1507
    %v1509 = vpop.f32.mrf.mxu0
    %v1510 = vadd.f32 %v1421, %v1509
    %1511 = vmatmul.bf16.gmra.mxu0 %v681
    %v1512 = vpop.f32.mrf.mxu0
    %v1513 = vadd.f32 %v1424, %v1512
    %v1514 = vpop.f32.mrf.mxu0
    %v1515 = vadd.f32 %v1426, %v1514
    %1516 = vmatmul.bf16.gmra.mxu0 %v689
    %v1517 = vpop.f32.mrf.mxu0
    %v1518 = vadd.f32 %v1429, %v1517
    %v1519 = vpop.f32.mrf.mxu0
    %v1520 = vadd.f32 %v1431, %v1519
    %1521 = vmatmul.bf16.gmra.mxu0 %v697
    %v1522 = vpop.f32.mrf.mxu0
    %v1523 = vadd.f32 %v1434, %v1522
    %v1524 = vpop.f32.mrf.mxu0
    %v1525 = vadd.f32 %v1436, %v1524
    %1526 = vmatmul.bf16.gmra.mxu0 %v705
    %v1527 = vpop.f32.mrf.mxu0
    %v1528 = vadd.f32 %v1439, %v1527
    %v1529 = vpop.f32.mrf.mxu0
    %v1530 = vadd.f32 %v1441, %v1529
    %1531 = vmatmul.bf16.gmra.mxu0 %v713
    %v1532 = vpop.f32.mrf.mxu0
    %v1533 = vadd.f32 %v1444, %v1532
    %v1534 = vpop.f32.mrf.mxu0
    %v1535 = vadd.f32 %v1446, %v1534
    %1536 = vdwg.mxu0
    %1537 = vmatpush.bf16.xpose.msra.mxu0 0
    %1538 = vmatpush.bf16.xpose.msra.mxu0 0
    %1539 = vmatpush.bf16.xpose.msra.mxu0 0
    %1540 = vmatpush.bf16.xpose.msra.mxu0 0
    %1541 = vmatpush.bf16.xpose.msra.mxu0 0
    %1542 = vmatpush.bf16.xpose.msra.mxu0 0
    %1543 = vmatpush.bf16.xpose.msra.mxu0 0
    %1544 = vmatpush.bf16.xpose.msra.mxu0 %v202
    %1545 = vmatmul.bf16.gmra.mxu0 %v594
    %v1546 = vpop.f32.mrf.mxu0
    %v1547 = vadd.f32 %v1458, %v1546
    %v1548 = vpop.f32.mrf.mxu0
    %v1549 = vadd.f32 %v1460, %v1548
    %1550 = vmatmul.bf16.gmra.mxu0 %v602
    %v1551 = vpop.f32.mrf.mxu0
    %v1552 = vadd.f32 %v1463, %v1551
    %v1553 = vpop.f32.mrf.mxu0
    %v1554 = vadd.f32 %v1465, %v1553
    %1555 = vmatmul.bf16.gmra.mxu0 %v610
    %v1556 = vpop.f32.mrf.mxu0
    %v1557 = vadd.f32 %v1468, %v1556
    %v1558 = vpop.f32.mrf.mxu0
    %v1559 = vadd.f32 %v1470, %v1558
    %1560 = vmatmul.bf16.gmra.mxu0 %v618
    %v1561 = vpop.f32.mrf.mxu0
    %v1562 = vadd.f32 %v1473, %v1561
    %v1563 = vpop.f32.mrf.mxu0
    %v1564 = vadd.f32 %v1475, %v1563
    %1565 = vmatmul.bf16.gmra.mxu0 %v626
    %v1566 = vpop.f32.mrf.mxu0
    %v1567 = vadd.f32 %v1478, %v1566
    %v1568 = vpop.f32.mrf.mxu0
    %v1569 = vadd.f32 %v1480, %v1568
    %1570 = vmatmul.bf16.gmra.mxu0 %v634
    %v1571 = vpop.f32.mrf.mxu0
    %v1572 = vadd.f32 %v1483, %v1571
    %v1573 = vpop.f32.mrf.mxu0
    %v1574 = vadd.f32 %v1485, %v1573
    %1575 = vmatmul.bf16.gmra.mxu0 %v642
    %v1576 = vpop.f32.mrf.mxu0
    %v1577 = vadd.f32 %v1488, %v1576
    %v1578 = vpop.f32.mrf.mxu0
    %v1579 = vadd.f32 %v1490, %v1578
    %1580 = vmatmul.bf16.gmra.mxu0 %v650
    %v1581 = vpop.f32.mrf.mxu0
    %v1582 = vadd.f32 %v1493, %v1581
    %v1583 = vpop.f32.mrf.mxu0
    %v1584 = vadd.f32 %v1495, %v1583
    %1585 = vmatmul.bf16.gmra.mxu0 %v658
    %v1586 = vpop.f32.mrf.mxu0
    %v1587 = vadd.f32 %v1498, %v1586
    %v1588 = vpop.f32.mrf.mxu0
    %v1589 = vadd.f32 %v1500, %v1588
    %1590 = vmatmul.bf16.gmra.mxu0 %v666
    %v1591 = vpop.f32.mrf.mxu0
    %v1592 = vadd.f32 %v1503, %v1591
    %v1593 = vpop.f32.mrf.mxu0
    %v1594 = vadd.f32 %v1505, %v1593
    %1595 = vmatmul.bf16.gmra.mxu0 %v674
    %v1596 = vpop.f32.mrf.mxu0
    %v1597 = vadd.f32 %v1508, %v1596
    %v1598 = vpop.f32.mrf.mxu0
    %v1599 = vadd.f32 %v1510, %v1598
    %1600 = vmatmul.bf16.gmra.mxu0 %v682
    %v1601 = vpop.f32.mrf.mxu0
    %v1602 = vadd.f32 %v1513, %v1601
    %v1603 = vpop.f32.mrf.mxu0
    %v1604 = vadd.f32 %v1515, %v1603
    %1605 = vmatmul.bf16.gmra.mxu0 %v690
    %v1606 = vpop.f32.mrf.mxu0
    %v1607 = vadd.f32 %v1518, %v1606
    %v1608 = vpop.f32.mrf.mxu0
    %v1609 = vadd.f32 %v1520, %v1608
    %1610 = vmatmul.bf16.gmra.mxu0 %v698
    %v1611 = vpop.f32.mrf.mxu0
    %v1612 = vadd.f32 %v1523, %v1611
    %v1613 = vpop.f32.mrf.mxu0
    %v1614 = vadd.f32 %v1525, %v1613
    %1615 = vmatmul.bf16.gmra.mxu0 %v706
    %v1616 = vpop.f32.mrf.mxu0
    %v1617 = vadd.f32 %v1528, %v1616
    %v1618 = vpop.f32.mrf.mxu0
    %v1619 = vadd.f32 %v1530, %v1618
    %1620 = vmatmul.bf16.gmra.mxu0 %v714
    %v1621 = vpop.f32.mrf.mxu0
    %v1622 = vadd.f32 %v1533, %v1621
    %v1623 = vpop.f32.mrf.mxu0
    %v1624 = vadd.f32 %v1535, %v1623
    %1625 = vdwg.mxu0
    %1626 = vmatpush.bf16.xpose.msra.mxu0 0
    %1627 = vmatpush.bf16.xpose.msra.mxu0 0
    %1628 = vmatpush.bf16.xpose.msra.mxu0 0
    %1629 = vmatpush.bf16.xpose.msra.mxu0 0
    %1630 = vmatpush.bf16.xpose.msra.mxu0 0
    %1631 = vmatpush.bf16.xpose.msra.mxu0 0
    %1632 = vmatpush.bf16.xpose.msra.mxu0 0
    %1633 = vmatpush.bf16.xpose.msra.mxu0 %v203
    %1634 = vmatmul.bf16.gmra.mxu0 %v595
    %v1635 = vpop.f32.mrf.mxu0
    %v1636 = vadd.f32 %v1547, %v1635
    %v1637 = vpop.f32.mrf.mxu0
    %v1638 = vadd.f32 %v1549, %v1637
    %1639 = vmatmul.bf16.gmra.mxu0 %v603
    %v1640 = vpop.f32.mrf.mxu0
    %v1641 = vadd.f32 %v1552, %v1640
    %v1642 = vpop.f32.mrf.mxu0
    %v1643 = vadd.f32 %v1554, %v1642
    %1644 = vmatmul.bf16.gmra.mxu0 %v611
    %v1645 = vpop.f32.mrf.mxu0
    %v1646 = vadd.f32 %v1557, %v1645
    %v1647 = vpop.f32.mrf.mxu0
    %v1648 = vadd.f32 %v1559, %v1647
    %1649 = vmatmul.bf16.gmra.mxu0 %v619
    %v1650 = vpop.f32.mrf.mxu0
    %v1651 = vadd.f32 %v1562, %v1650
    %v1652 = vpop.f32.mrf.mxu0
    %v1653 = vadd.f32 %v1564, %v1652
    %1654 = vmatmul.bf16.gmra.mxu0 %v627
    %v1655 = vpop.f32.mrf.mxu0
    %v1656 = vadd.f32 %v1567, %v1655
    %v1657 = vpop.f32.mrf.mxu0
    %v1658 = vadd.f32 %v1569, %v1657
    %1659 = vmatmul.bf16.gmra.mxu0 %v635
    %v1660 = vpop.f32.mrf.mxu0
    %v1661 = vadd.f32 %v1572, %v1660
    %v1662 = vpop.f32.mrf.mxu0
    %v1663 = vadd.f32 %v1574, %v1662
    %1664 = vmatmul.bf16.gmra.mxu0 %v643
    %v1665 = vpop.f32.mrf.mxu0
    %v1666 = vadd.f32 %v1577, %v1665
    %v1667 = vpop.f32.mrf.mxu0
    %v1668 = vadd.f32 %v1579, %v1667
    %1669 = vmatmul.bf16.gmra.mxu0 %v651
    %v1670 = vpop.f32.mrf.mxu0
    %v1671 = vadd.f32 %v1582, %v1670
    %v1672 = vpop.f32.mrf.mxu0
    %v1673 = vadd.f32 %v1584, %v1672
    %1674 = vmatmul.bf16.gmra.mxu0 %v659
    %v1675 = vpop.f32.mrf.mxu0
    %v1676 = vadd.f32 %v1587, %v1675
    %v1677 = vpop.f32.mrf.mxu0
    %v1678 = vadd.f32 %v1589, %v1677
    %1679 = vmatmul.bf16.gmra.mxu0 %v667
    %v1680 = vpop.f32.mrf.mxu0
    %v1681 = vadd.f32 %v1592, %v1680
    %v1682 = vpop.f32.mrf.mxu0
    %v1683 = vadd.f32 %v1594, %v1682
    %1684 = vmatmul.bf16.gmra.mxu0 %v675
    %v1685 = vpop.f32.mrf.mxu0
    %v1686 = vadd.f32 %v1597, %v1685
    %v1687 = vpop.f32.mrf.mxu0
    %v1688 = vadd.f32 %v1599, %v1687
    %1689 = vmatmul.bf16.gmra.mxu0 %v683
    %v1690 = vpop.f32.mrf.mxu0
    %v1691 = vadd.f32 %v1602, %v1690
    %v1692 = vpop.f32.mrf.mxu0
    %v1693 = vadd.f32 %v1604, %v1692
    %1694 = vmatmul.bf16.gmra.mxu0 %v691
    %v1695 = vpop.f32.mrf.mxu0
    %v1696 = vadd.f32 %v1607, %v1695
    %v1697 = vpop.f32.mrf.mxu0
    %v1698 = vadd.f32 %v1609, %v1697
    %1699 = vmatmul.bf16.gmra.mxu0 %v699
    %v1700 = vpop.f32.mrf.mxu0
    %v1701 = vadd.f32 %v1612, %v1700
    %v1702 = vpop.f32.mrf.mxu0
    %v1703 = vadd.f32 %v1614, %v1702
    %1704 = vmatmul.bf16.gmra.mxu0 %v707
    %v1705 = vpop.f32.mrf.mxu0
    %v1706 = vadd.f32 %v1617, %v1705
    %v1707 = vpop.f32.mrf.mxu0
    %v1708 = vadd.f32 %v1619, %v1707
    %1709 = vmatmul.bf16.gmra.mxu0 %v715
    %v1710 = vpop.f32.mrf.mxu0
    %v1711 = vadd.f32 %v1622, %v1710
    %v1712 = vpop.f32.mrf.mxu0
    %v1713 = vadd.f32 %v1624, %v1712
    %1714 = vdwg.mxu0
    %1715 = vmatpush.bf16.xpose.msra.mxu0 0
    %1716 = vmatpush.bf16.xpose.msra.mxu0 0
    %1717 = vmatpush.bf16.xpose.msra.mxu0 0
    %1718 = vmatpush.bf16.xpose.msra.mxu0 0
    %1719 = vmatpush.bf16.xpose.msra.mxu0 0
    %1720 = vmatpush.bf16.xpose.msra.mxu0 0
    %1721 = vmatpush.bf16.xpose.msra.mxu0 0
    %1722 = vmatpush.bf16.xpose.msra.mxu0 %v204
    %1723 = vmatmul.bf16.gmra.mxu0 %v596
    %v1724 = vpop.f32.mrf.mxu0
    %v1725 = vadd.f32 %v1636, %v1724
    %v1726 = vpop.f32.mrf.mxu0
    %v1727 = vadd.f32 %v1638, %v1726
    %1728 = vmatmul.bf16.gmra.mxu0 %v604
    %v1729 = vpop.f32.mrf.mxu0
    %v1730 = vadd.f32 %v1641, %v1729
    %v1731 = vpop.f32.mrf.mxu0
    %v1732 = vadd.f32 %v1643, %v1731
    %1733 = vmatmul.bf16.gmra.mxu0 %v612
    %v1734 = vpop.f32.mrf.mxu0
    %v1735 = vadd.f32 %v1646, %v1734
    %v1736 = vpop.f32.mrf.mxu0
    %v1737 = vadd.f32 %v1648, %v1736
    %1738 = vmatmul.bf16.gmra.mxu0 %v620
    %v1739 = vpop.f32.mrf.mxu0
    %v1740 = vadd.f32 %v1651, %v1739
    %v1741 = vpop.f32.mrf.mxu0
    %v1742 = vadd.f32 %v1653, %v1741
    %1743 = vmatmul.bf16.gmra.mxu0 %v628
    %v1744 = vpop.f32.mrf.mxu0
    %v1745 = vadd.f32 %v1656, %v1744
    %v1746 = vpop.f32.mrf.mxu0
    %v1747 = vadd.f32 %v1658, %v1746
    %1748 = vmatmul.bf16.gmra.mxu0 %v636
    %v1749 = vpop.f32.mrf.mxu0
    %v1750 = vadd.f32 %v1661, %v1749
    %v1751 = vpop.f32.mrf.mxu0
    %v1752 = vadd.f32 %v1663, %v1751
    %1753 = vmatmul.bf16.gmra.mxu0 %v644
    %v1754 = vpop.f32.mrf.mxu0
    %v1755 = vadd.f32 %v1666, %v1754
    %v1756 = vpop.f32.mrf.mxu0
    %v1757 = vadd.f32 %v1668, %v1756
    %1758 = vmatmul.bf16.gmra.mxu0 %v652
    %v1759 = vpop.f32.mrf.mxu0
    %v1760 = vadd.f32 %v1671, %v1759
    %v1761 = vpop.f32.mrf.mxu0
    %v1762 = vadd.f32 %v1673, %v1761
    %1763 = vmatmul.bf16.gmra.mxu0 %v660
    %v1764 = vpop.f32.mrf.mxu0
    %v1765 = vadd.f32 %v1676, %v1764
    %v1766 = vpop.f32.mrf.mxu0
    %v1767 = vadd.f32 %v1678, %v1766
    %1768 = vmatmul.bf16.gmra.mxu0 %v668
    %v1769 = vpop.f32.mrf.mxu0
    %v1770 = vadd.f32 %v1681, %v1769
    %v1771 = vpop.f32.mrf.mxu0
    %v1772 = vadd.f32 %v1683, %v1771
    %1773 = vmatmul.bf16.gmra.mxu0 %v676
    %v1774 = vpop.f32.mrf.mxu0
    %v1775 = vadd.f32 %v1686, %v1774
    %v1776 = vpop.f32.mrf.mxu0
    %v1777 = vadd.f32 %v1688, %v1776
    %1778 = vmatmul.bf16.gmra.mxu0 %v684
    %v1779 = vpop.f32.mrf.mxu0
    %v1780 = vadd.f32 %v1691, %v1779
    %v1781 = vpop.f32.mrf.mxu0
    %v1782 = vadd.f32 %v1693, %v1781
    %1783 = vmatmul.bf16.gmra.mxu0 %v692
    %v1784 = vpop.f32.mrf.mxu0
    %v1785 = vadd.f32 %v1696, %v1784
    %v1786 = vpop.f32.mrf.mxu0
    %v1787 = vadd.f32 %v1698, %v1786
    %1788 = vmatmul.bf16.gmra.mxu0 %v700
    %v1789 = vpop.f32.mrf.mxu0
    %v1790 = vadd.f32 %v1701, %v1789
    %v1791 = vpop.f32.mrf.mxu0
    %v1792 = vadd.f32 %v1703, %v1791
    %1793 = vmatmul.bf16.gmra.mxu0 %v708
    %v1794 = vpop.f32.mrf.mxu0
    %v1795 = vadd.f32 %v1706, %v1794
    %v1796 = vpop.f32.mrf.mxu0
    %v1797 = vadd.f32 %v1708, %v1796
    %1798 = vmatmul.bf16.gmra.mxu0 %v716
    %v1799 = vpop.f32.mrf.mxu0
    %v1800 = vadd.f32 %v1711, %v1799
    %v1801 = vpop.f32.mrf.mxu0
    %v1802 = vadd.f32 %v1713, %v1801
    %1803 = vdwg.mxu0
    %v1804 = vmul.f32 %v1725, %v1725
    %v1805 = vmul.f32 %v1727, %v1727
    %v1806 = vmul.f32 %v1730, %v1730
    %v1807 = vmul.f32 %v1732, %v1732
    %v1808 = vmul.f32 %v1735, %v1735
    %v1809 = vmul.f32 %v1737, %v1737
    %v1810 = vmul.f32 %v1740, %v1740
    %v1811 = vmul.f32 %v1742, %v1742
    %v1812 = vmul.f32 %v1745, %v1745
    %v1813 = vmul.f32 %v1747, %v1747
    %v1814 = vmul.f32 %v1750, %v1750
    %v1815 = vmul.f32 %v1752, %v1752
    %v1816 = vmul.f32 %v1755, %v1755
    %v1817 = vmul.f32 %v1757, %v1757
    %v1818 = vmul.f32 %v1760, %v1760
    %v1819 = vmul.f32 %v1762, %v1762
    %v1820 = vmul.f32 %v1765, %v1765
    %v1821 = vmul.f32 %v1767, %v1767
    %v1822 = vmul.f32 %v1770, %v1770
    %v1823 = vmul.f32 %v1772, %v1772
    %v1824 = vmul.f32 %v1775, %v1775
    %v1825 = vmul.f32 %v1777, %v1777
    %v1826 = vmul.f32 %v1780, %v1780
    %v1827 = vmul.f32 %v1782, %v1782
    %v1828 = vmul.f32 %v1785, %v1785
    %v1829 = vmul.f32 %v1787, %v1787
    %v1830 = vmul.f32 %v1790, %v1790
    %v1831 = vmul.f32 %v1792, %v1792
    %v1832 = vmul.f32 %v1795, %v1795
    %v1833 = vmul.f32 %v1797, %v1797
    %v1834 = vmul.f32 %v1800, %v1800
    %v1835 = vmul.f32 %v1802, %v1802
    %vm1836 = vcmask 15360
    %v1837 = vsel %vm1836, %v1804, 0.0
    %v1838 = vsel %vm1836, %v1805, 0.0
    %v1839 = vadd.f32 %v1837, %v1838
    %v1840 = vsel %vm1836, %v1806, 0.0
    %v1841 = vadd.f32 %v1839, %v1840
    %v1842 = vsel %vm1836, %v1807, 0.0
    %v1843 = vadd.f32 %v1841, %v1842
    %v1844 = vsel %vm1836, %v1808, 0.0
    %v1845 = vadd.f32 %v1843, %v1844
    %v1846 = vsel %vm1836, %v1809, 0.0
    %v1847 = vadd.f32 %v1845, %v1846
    %v1848 = vsel %vm1836, %v1810, 0.0
    %v1849 = vadd.f32 %v1847, %v1848
    %v1850 = vsel %vm1836, %v1811, 0.0
    %v1851 = vadd.f32 %v1849, %v1850
    %v1852 = vsel %vm1836, %v1812, 0.0
    %v1853 = vadd.f32 %v1851, %v1852
    %v1854 = vsel %vm1836, %v1813, 0.0
    %v1855 = vadd.f32 %v1853, %v1854
    %v1856 = vsel %vm1836, %v1814, 0.0
    %v1857 = vadd.f32 %v1855, %v1856
    %v1858 = vsel %vm1836, %v1815, 0.0
    %v1859 = vadd.f32 %v1857, %v1858
    %v1860 = vsel %vm1836, %v1816, 0.0
    %v1861 = vadd.f32 %v1859, %v1860
    %v1862 = vsel %vm1836, %v1817, 0.0
    %v1863 = vadd.f32 %v1861, %v1862
    %v1864 = vsel %vm1836, %v1818, 0.0
    %v1865 = vadd.f32 %v1863, %v1864
    %v1866 = vsel %vm1836, %v1819, 0.0
    %v1867 = vadd.f32 %v1865, %v1866
    %v1868 = vsel %vm1836, %v1820, 0.0
    %v1869 = vadd.f32 %v1867, %v1868
    %v1870 = vsel %vm1836, %v1821, 0.0
    %v1871 = vadd.f32 %v1869, %v1870
    %v1872 = vsel %vm1836, %v1822, 0.0
    %v1873 = vadd.f32 %v1871, %v1872
    %v1874 = vsel %vm1836, %v1823, 0.0
    %v1875 = vadd.f32 %v1873, %v1874
    %v1876 = vsel %vm1836, %v1824, 0.0
    %v1877 = vadd.f32 %v1875, %v1876
    %v1878 = vsel %vm1836, %v1825, 0.0
    %v1879 = vadd.f32 %v1877, %v1878
    %v1880 = vsel %vm1836, %v1826, 0.0
    %v1881 = vadd.f32 %v1879, %v1880
    %v1882 = vsel %vm1836, %v1827, 0.0
    %v1883 = vadd.f32 %v1881, %v1882
    %v1884 = vsel %vm1836, %v1828, 0.0
    %v1885 = vadd.f32 %v1883, %v1884
    %v1886 = vsel %vm1836, %v1829, 0.0
    %v1887 = vadd.f32 %v1885, %v1886
    %v1888 = vsel %vm1836, %v1830, 0.0
    %v1889 = vadd.f32 %v1887, %v1888
    %v1890 = vsel %vm1836, %v1831, 0.0
    %v1891 = vadd.f32 %v1889, %v1890
    %v1892 = vsel %vm1836, %v1832, 0.0
    %v1893 = vadd.f32 %v1891, %v1892
    %v1894 = vsel %vm1836, %v1833, 0.0
    %v1895 = vadd.f32 %v1893, %v1894
    %v1896 = vsel %vm1836, %v1834, 0.0
    %v1897 = vadd.f32 %v1895, %v1896
    %v1898 = vsel %vm1836, %v1835, 0.0
    %v1899 = vadd.f32 %v1897, %v1898
    %v1900 = vrot.slane %v1899, 4
    %v1901 = vadd.f32 %v1899, %v1900
    %v1902 = vrot.slane %v1901, 2
    %v1903 = vadd.f32 %v1901, %v1902
    %v1904 = vrot.slane %v1903, 1
    %v1905 = vadd.f32 %v1903, %v1904
    %v1906 = vmul.f32 %v1905, 0.125
    %v1907 = vrsqrt.pop %v1906
    %v1908 = vmul.f32 %v1907, %v1906
    %v1909 = vmul.f32 %v1908, %v1907
    %v1910 = vmul.f32 0.5, %v1909
    %v1911 = vsub.f32 1.5, %v1910
    %v1912 = vmul.f32 %v1907, %v1911
    %v1913 = vmul.f32 %v1906, %v1912
    %vm1914 = vcmp.eq.f32.partialorder %v1906, inf
    %v1915 = vsel %vm1914, %v1906, %v1913
    %vm1916 = vcmp.eq.f32.partialorder %v1906, 0.0
    %v1917 = vand.u32 %v1906, 2147483648
    %v1918 = vsel %vm1916, %v1917, %v1915
    %vm1919 = vcmask 8192
    %v1920 = vsel %vm1919, %v1918, 0.0
    %1921 = vadd.xlane.f32.xlu0 %v1920
    %v1922 = vpop.xlane.xlu0 %1921
    %v1923 = vrot.slane %v1922, 4
    %v1924 = vadd.f32 %v1922, %v1923
    %v1925 = vrot.slane %v1924, 2
    %v1926 = vadd.f32 %v1924, %v1925
    %v1927 = vrot.slane %v1926, 1
    %v1928 = vadd.f32 %v1926, %v1927
    %s1929 = vtos %v1928
    %s1930 = smul.f32 %s1929, 0.5
    %s1931 = sld [smem:[#allocation2]]
    %s1932 = ssub.f32 %s1930, %s1931
    %s1933 = smul.f32 %s1932, 0.01
    %s1934 = sadd.f32 %s1931, %s1933
    %v1935 = vstv %s1934
    %v1936 = vsub.f32 %v1918, %v1935
    %v1937 = vmul.f32 %v1936, %v1936
    %v1938 = vsel %vm1919, %v1937, 0.0
    %1939 = vadd.xlane.f32.xlu0 %v1938
    %v1940 = vpop.xlane.xlu0 %1939
    %v1941 = vrot.slane %v1940, 4
    %v1942 = vadd.f32 %v1940, %v1941
    %v1943 = vrot.slane %v1942, 2
    %v1944 = vadd.f32 %v1942, %v1943
    %v1945 = vrot.slane %v1944, 1
    %v1946 = vadd.f32 %v1944, %v1945
    %s1947 = vtos %v1946
    %s1948 = smul.f32 %s1947, 0.5
    %v1949 = vlaneseq
    %v1950 = vand.u32 %v1949, 127
    %vm1951 = vcmp.eq.s32.totalorder %v1950, 126
    %vm1952 = vcmp.eq.s32.totalorder %v1950, 127
    %v1953 = vstv %s1948
    %v1954 = vsel %vm1952, %v1953, 0.0
    %v1955 = vsel %vm1951, %v1935, %v1954
    %v1956 = vsel %vm1836, %v1918, 0.0
    %v1957 = vadd.f32 %v1956, %v1955
    %1958 = vst [vmem:[%s5] sm:$0x1] %v1957
    // Predicated region
    $region22: #{generator_path_regularizer.1} parent=1 // pred_check
      _
    $region23: #{generator_path_regularizer.1} parent=1 // pred_check_branch
      %1960 = sbr.rel (0) target = $region25
    $region24: #{generator_path_regularizer.1} parent=1 // pred_region
      _
    $region25: #{generator_path_regularizer.1} parent=1 // pred_fallthru
      _
    // Predicated region
    $region26: #{generator_path_regularizer.1} parent=1 // pred_check
      _
    $region27: #{generator_path_regularizer.1} parent=1 // pred_check_branch
      %1962 = sbr.rel (0) target = $region29
    $region28: #{generator_path_regularizer.1} parent=1 // pred_region
      _
    $region29: #{generator_path_regularizer.1} parent=1 // pred_fallthru
      _
    // Predicated region
    $region30: #{generator_path_regularizer.1} parent=1 // pred_check
      _
    $region31: #{generator_path_regularizer.1} parent=1 // pred_check_branch
      %1964 = sbr.rel (0) target = $region33
    $region32: #{generator_path_regularizer.1} parent=1 // pred_region
      _
    $region33: #{generator_path_regularizer.1} parent=1 // pred_fallthru
      _
    // Predicated region
    $region34: #{generator_path_regularizer.1} parent=1 // pred_check
      _
    $region35: #{generator_path_regularizer.1} parent=1 // pred_check_branch
      %1966 = sbr.rel (0) target = $region37
    $region36: #{generator_path_regularizer.1} parent=1 // pred_region
      _
    $region37: #{generator_path_regularizer.1} parent=1 // pred_fallthru
      _
    %1967 = vsyncpa [#allocation4], 1

</llo_original>
